<compile_context>
chip_gen: v7x
topology: tpu7x:2x2x1
jax: 0.10.0
libtpu: 0.0.40
codegen_flags: <defaults>
</compile_context>

<pallas_src>
import functools

import jax
import jax.numpy as jnp
from jax import lax
from jax.experimental import pallas as pl
from jax.experimental.pallas import tpu as pltpu


# Use the MXU block-diagonal averaging matmul for LayerNorm reductions only while its work
# (~4*WC bf16 MACs/element) stays comparable to the VPU/XLU work it replaces.
_MXU_LN_MAX_WC = 512


def _roll(x, shift, axis):
    """Circular roll (jnp.roll semantics) with a non-negative static shift."""
    n = x.shape[axis]
    s = shift % n
    if s == 0:
        return x
    return pltpu.roll(x, s, axis)


def _msef_kernel(Bt, H, W, C, use_mxu_ln,
                 x_ref, gamma_ref, beta_ref, taps_ref, dwb_ref,
                 fc1wt_ref, fc1b_ref, fc2w_ref, fc2b_ref, *rest):
    """One (Bt, H, W*C) lane-dense block per grid step (Bt images, unrolled)."""
    if use_mxu_ln:
        avg_ref, o_ref = rest
    else:
        (o_ref,) = rest

    WC = W * C
    lane = lax.broadcasted_iota(jnp.int32, (1, WC), 1)        # lane index j = w*C + c
    row = lax.broadcasted_iota(jnp.int32, (H, 1), 0)
    inv_c = 1.0 / C

    if use_mxu_ln:
        # Per-pixel channel mean via block-diagonal (WC, WC) averaging matmul on the
        # otherwise idle MXU.  hi/lo bf16 split recovers ~f32 accuracy from two plain bf16
        # passes (accumulation is f32; 1/C and hi are bf16-exact; lo is O(2^-9) small).
        avg = avg_ref[...]                                     # (WC, WC) bf16

        def group_mean(v):                                     # (H, WC) f32 -> per-pixel mean
            hi = v.astype(jnp.bfloat16)
            lo = (v - hi.astype(jnp.float32)).astype(jnp.bfloat16)
            return (jnp.dot(hi, avg, preferred_element_type=jnp.float32)
                    + jnp.dot(lo, avg, preferred_element_type=jnp.float32))
    else:
        cmod = lane % C                                        # channel within its pixel group

        def group_mean(v):
            # within-group (size C) all-reduce via a log2(C) butterfly of lane rolls (XLU)
            s = 1
            while s < C:
                wrapped = jnp.where(cmod >= s,
                                    _roll(v, s, axis=1),
                                    _roll(v, WC - C + s, axis=1))
                v = v + wrapped
                s *= 2
            return v * inv_c

    gamma = gamma_ref[...]
    beta = beta_ref[...]
    taps = taps_ref[...]                                       # (9, WC)   tap (ky*3+kx), W-tiled
    dwb = dwb_ref[...]                                         # (1, WC)
    fc1wt = fc1wt_ref[...]                                     # (CR, WC)  pre-scaled by 1/(H*W)
    fc1b = fc1b_ref[...]                                       # (CR, 1)
    fc2w = fc2w_ref[...]                                       # (CR, WC)
    fc2b = fc2b_ref[...]                                       # (1, WC)

    for b in range(Bt):                                        # small Bt, unrolled at trace time
        # ---- LayerNorm over the C channels of each pixel (eps=1e-5, biased var) ----------
        x = x_ref[b].astype(jnp.float32)                       # (H, WC)
        mean = group_mean(x)
        d = x - mean
        var = group_mean(d * d)
        xn = d * lax.rsqrt(var + 1e-5) * gamma + beta
        del x, mean, var, d                                    # x is re-read for the residual

        # ---- SE attention branch (pure VPU/XLU; no M=1 MXU matmul) ------------------------
        colsum = jnp.sum(xn, axis=0, keepdims=True)            # (1, WC): sum over H
        h1 = jnp.sum(fc1wt * colsum, axis=1, keepdims=True)    # (CR, 1): avg-pool + fc1 fused
        h1 = jnp.maximum(h1 + fc1b, 0.0)                       # relu
        scale = jnp.tanh(jnp.sum(fc2w * h1, axis=0, keepdims=True) + fc2b)   # (1, WC)
        x2 = xn * scale

        # ---- 3x3 depthwise conv, padding=1 (rolls on resident values + edge masks) --------
        c_m1 = jnp.where(lane >= C, _roll(xn, C, axis=1), 0.0)            # xn[h, w-1, c]
        c_p1 = jnp.where(lane < WC - C, _roll(xn, WC - C, axis=1), 0.0)   # xn[h, w+1, c]
        a0 = c_m1 * taps[0:1] + xn * taps[1:2] + c_p1 * taps[2:3]         # source row h-1
        a1 = c_m1 * taps[3:4] + xn * taps[4:5] + c_p1 * taps[5:6]         # source row h
        a2 = c_m1 * taps[6:7] + xn * taps[7:8] + c_p1 * taps[8:9]         # source row h+1
        conv = a1
        conv = conv + jnp.where(row >= 1, _roll(a0, 1, axis=0), 0.0)
        conv = conv + jnp.where(row <= H - 2, _roll(a2, H - 1, axis=0), 0.0)
        x1 = conv + dwb

        # ---- fuse + residual (re-read x from VMEM; cheap at 3 vld/cycle) ------------------
        o_ref[b] = (x1 * x2 + x_ref[b].astype(jnp.float32)).astype(o_ref.dtype)


def init_params(key, C, reduction=16):
    """Deterministic parameter init mirroring the PyTorch module's __init__/_init_weights."""
    CR = max(C // reduction, 1)
    k1, k2, k3 = jax.random.split(key, 3)
    gamma = jnp.ones((C,), jnp.float32)
    beta = jnp.zeros((C,), jnp.float32)
    b_dw = (6.0 / 9.0) ** 0.5                                  # kaiming_uniform, fan_in = 9
    dww = jax.random.uniform(k1, (3, 3, C), jnp.float32, -b_dw, b_dw)
    dwb = jnp.zeros((C,), jnp.float32)
    b1 = (6.0 / C) ** 0.5
    fc1w = jax.random.uniform(k2, (C, CR), jnp.float32, -b1, b1)   # stored (in, out)
    fc1b = jnp.zeros((CR,), jnp.float32)
    b2 = (6.0 / CR) ** 0.5
    fc2w = jax.random.uniform(k3, (CR, C), jnp.float32, -b2, b2)
    fc2b = jnp.zeros((C,), jnp.float32)
    return dict(gamma=gamma, beta=beta, dww=dww, dwb=dwb,
                fc1w=fc1w, fc1b=fc1b, fc2w=fc2w, fc2b=fc2b)


def _prepare_params(p, H, W, C):
    """Pre-tile per-channel parameters to the lane-dense (., W*C) layout (tiny, one-off)."""
    CR = p["fc1w"].shape[1]
    tile_w = lambda v: jnp.tile(v.reshape(1, C), (1, W))       # element[w*C+c] = v[c]
    gamma_t = tile_w(p["gamma"])
    beta_t = tile_w(p["beta"])
    dwb_t = tile_w(p["dwb"])
    fc2b_t = tile_w(p["fc2b"])
    taps = jnp.tile(p["dww"].reshape(9, C), (1, W))            # (9, W*C)
    fc1wt = jnp.tile(p["fc1w"].T, (1, W)) / float(H * W)       # (CR, W*C), includes 1/(H*W)
    fc1b_c = p["fc1b"].reshape(CR, 1)
    fc2w_t = jnp.tile(p["fc2w"], (1, W))                       # (CR, W*C)
    return gamma_t, beta_t, taps, dwb_t, fc1wt, fc1b_c, fc2w_t, fc2b_t


def _group_avg_matrix(W, C):
    """Block-diagonal (WC, WC) matrix of 1/C blocks (bf16-exact for power-of-two C)."""
    WC = W * C
    g = jnp.arange(WC, dtype=jnp.int32) // C
    return jnp.where(g[:, None] == g[None, :], 1.0 / C, 0.0).astype(jnp.bfloat16)


def msef_block_nhwc(x_nhwc, p):
    """NHWC in / NHWC out (no layout transposes; the (B, H, W*C) view is a free reshape)."""
    B, H, W, C = x_nhwc.shape
    CR = p["fc1w"].shape[1]
    WC = W * C
    assert C >= 16 and (C & (C - 1)) == 0, "kernel assumes power-of-two C >= 16"

    x2d = x_nhwc.reshape(B, H, WC)                             # layout-preserving reshape
    params = _prepare_params(p, H, W, C)

    use_mxu_ln = WC <= _MXU_LN_MAX_WC
    extra_inputs = [_group_avg_matrix(W, C)] if use_mxu_ln else []

    # Multi-image blocks: amortize per-step overhead / tiny DMAs for small shapes.
    img_bytes = H * WC * x_nhwc.dtype.itemsize
    bt_cap = int(min(8, max(1, (2 << 20) // max(img_bytes, 1))))
    Bt = max(d for d in range(1, bt_cap + 1) if B % d == 0)
    block_bytes = Bt * H * WC * 4

    def fixed(arr):
        r = arr.ndim
        return pl.BlockSpec(arr.shape, lambda b: (0,) * r)

    # VMEM budget: never request more than the physical capacity (v7x: 64 MiB / core).
    try:
        vmem_cap = int(pltpu.get_tpu_info().vmem_capacity_bytes)
    except Exception:
        vmem_cap = 64 << 20
    param_bytes = (13 + 2 * CR) * WC * 4 + (2 * WC * WC if use_mxu_ln else 0)
    need = 10 * block_bytes + 2 * param_bytes + (4 << 20)
    vmem_limit = int(min(max(32 << 20, need), vmem_cap - (8 << 20)))
    vmem_limit = max(vmem_limit, 16 << 20)

    cost = pl.CostEstimate(
        flops=int(B * H * WC * (40 + (8 * WC if use_mxu_ln else 4 * max(C.bit_length() - 1, 1)))),
        transcendentals=int(B * H * WC + B * WC),
        bytes_accessed=int(2 * B * H * WC * x_nhwc.dtype.itemsize + 2 * param_bytes),
    )

    const_arrays = [*params, *extra_inputs]
    in_specs = [pl.BlockSpec((Bt, H, WC), lambda b: (b, 0, 0))] + [fixed(a) for a in const_arrays]

    out2d = pl.pallas_call(
        functools.partial(_msef_kernel, Bt, H, W, C, use_mxu_ln),
        out_shape=jax.ShapeDtypeStruct((B, H, WC), x_nhwc.dtype),
        grid_spec=pltpu.PrefetchScalarGridSpec(
            num_scalar_prefetch=0,
            grid=(B // Bt,),
            in_specs=in_specs,
            out_specs=pl.BlockSpec((Bt, H, WC), lambda b: (b, 0, 0)),
        ),
        compiler_params=pltpu.CompilerParams(
            dimension_semantics=("parallel",),                 # image blocks independent
            vmem_limit_bytes=vmem_limit,
        ),
        cost_estimate=cost,
        input_output_aliases={0: 0},                           # output overwrites input in HBM
    )(x2d, *const_arrays)

    return out2d.reshape(B, H, W, C)


def msef_block(x_nchw, p):
    """NCHW public interface matching the PyTorch module.

    NOTE: the two full-tensor transposes below are pure glue and roughly double the op's HBM
    traffic; if the surrounding model can stay NHWC, call msef_block_nhwc directly (or fold
    the transposes into adjacent producer/consumer ops).
    """
    x_nhwc = jnp.transpose(x_nchw, (0, 2, 3, 1))
    out = msef_block_nhwc(x_nhwc, p)
    return jnp.transpose(out, (0, 3, 1, 2))


def msef_reference(x_nchw, p):
    """Pure-JAX reference of the PyTorch forward (for verification)."""
    B, C, H, W = x_nchw.shape
    x = jnp.transpose(x_nchw, (0, 2, 3, 1))
    mean = jnp.mean(x, -1, keepdims=True)
    var = jnp.mean((x - mean) ** 2, -1, keepdims=True)
    xn = (x - mean) / jnp.sqrt(var + 1e-5) * p["gamma"] + p["beta"]
    xp = jnp.pad(xn, ((0, 0), (1, 1), (1, 1), (0, 0)))
    acc = jnp.zeros_like(xn)
    for dy in range(3):
        for dx in range(3):
            acc = acc + xp[:, dy:dy + H, dx:dx + W, :] * p["dww"][dy, dx]
    x1 = acc + p["dwb"]
    pooled = jnp.mean(xn, axis=(1, 2))                         # (B, C)
    h1 = jnp.maximum(pooled @ p["fc1w"] + p["fc1b"], 0.0)
    sc = jnp.tanh(h1 @ p["fc2w"] + p["fc2b"])
    x2 = xn * sc[:, None, None, :]
    out = x1 * x2 + x
    return jnp.transpose(out, (0, 3, 1, 2))


if __name__ == "__main__":
    # channels must be >= 16 so that SEBlock's reduction (C // 16) is non-degenerate
    B, C, H, W = 2, 16, 16, 16
    key = jax.random.PRNGKey(0)
    kx, kp = jax.random.split(key)
    x = jax.random.normal(kx, (B, C, H, W), dtype=jnp.float32)
    params = init_params(kp, C)

    out = msef_block(x, params)
    out = jax.block_until_ready(out)

    ref = msef_reference(x, params)
    assert out.shape == (B, C, H, W)
    max_err = float(jnp.max(jnp.abs(out - ref)))
    assert jnp.allclose(out, ref, atol=1e-3, rtol=1e-3), f"mismatch vs JAX reference (max abs err {max_err})"
    print("KERNEL_OK")
</pallas_src>

<mosaic_0001>
module attributes {stable_mosaic.version = 11 : i64} {
  func.func @_msef_kernel(%arg0: i32, %arg1: memref<2x16x256xf32, #tpu.memory_space<vmem>>, %arg2: memref<1x256xf32, #tpu.memory_space<vmem>>, %arg3: memref<1x256xf32, #tpu.memory_space<vmem>>, %arg4: memref<9x256xf32, #tpu.memory_space<vmem>>, %arg5: memref<1x256xf32, #tpu.memory_space<vmem>>, %arg6: memref<1x256xf32, #tpu.memory_space<vmem>>, %arg7: memref<1x1xf32, #tpu.memory_space<vmem>>, %arg8: memref<1x256xf32, #tpu.memory_space<vmem>>, %arg9: memref<1x256xf32, #tpu.memory_space<vmem>>, %arg10: memref<256x256xbf16, #tpu.memory_space<vmem>>, %arg11: memref<2x16x256xf32, #tpu.memory_space<vmem>>) attributes {dimension_semantics = [#tpu.dimension_semantics<parallel>], iteration_bounds = array<i64: 1>, scalar_prefetch = 0 : i64, scratch_operands = 0 : i64, tpu.core_type = #tpu.core_type<tc>, window_params = [{transform_indices = @transform_0, window_bounds = array<i64: 2, 16, 256>}, {pipeline_mode = #tpu.pipeline_mode<synchronous>, transform_indices = @transform_1, window_bounds = array<i64: 1, 256>}, {pipeline_mode = #tpu.pipeline_mode<synchronous>, transform_indices = @transform_2, window_bounds = array<i64: 1, 256>}, {pipeline_mode = #tpu.pipeline_mode<synchronous>, transform_indices = @transform_3, window_bounds = array<i64: 9, 256>}, {pipeline_mode = #tpu.pipeline_mode<synchronous>, transform_indices = @transform_4, window_bounds = array<i64: 1, 256>}, {pipeline_mode = #tpu.pipeline_mode<synchronous>, transform_indices = @transform_5, window_bounds = array<i64: 1, 256>}, {pipeline_mode = #tpu.pipeline_mode<synchronous>, transform_indices = @transform_6, window_bounds = array<i64: 1, 1>}, {pipeline_mode = #tpu.pipeline_mode<synchronous>, transform_indices = @transform_7, window_bounds = array<i64: 1, 256>}, {pipeline_mode = #tpu.pipeline_mode<synchronous>, transform_indices = @transform_8, window_bounds = array<i64: 1, 256>}, {pipeline_mode = #tpu.pipeline_mode<synchronous>, transform_indices = @transform_9, window_bounds = array<i64: 256, 256>}, {transform_indices = @transform_10, window_bounds = array<i64: 2, 16, 256>}]} {
    %0 = tpu.iota {dimensions = array<i32: 1>} : vector<1x256xi32>
    %1 = tpu.iota {dimensions = array<i32: 0>} : vector<16x1xi32>
    %c0 = arith.constant 0 : index
    %c0_0 = arith.constant 0 : index
    %2 = vector.load %arg10[%c0, %c0_0] : memref<256x256xbf16, #tpu.memory_space<vmem>>, vector<256x256xbf16>
    %c0_1 = arith.constant 0 : index
    %c0_2 = arith.constant 0 : index
    %3 = vector.load %arg2[%c0_1, %c0_2] : memref<1x256xf32, #tpu.memory_space<vmem>>, vector<1x256xf32>
    %c0_3 = arith.constant 0 : index
    %c0_4 = arith.constant 0 : index
    %4 = vector.load %arg3[%c0_3, %c0_4] : memref<1x256xf32, #tpu.memory_space<vmem>>, vector<1x256xf32>
    %c0_5 = arith.constant 0 : index
    %c0_6 = arith.constant 0 : index
    %5 = vector.load %arg4[%c0_5, %c0_6] : memref<9x256xf32, #tpu.memory_space<vmem>>, vector<9x256xf32>
    %c0_7 = arith.constant 0 : index
    %c0_8 = arith.constant 0 : index
    %6 = vector.load %arg5[%c0_7, %c0_8] : memref<1x256xf32, #tpu.memory_space<vmem>>, vector<1x256xf32>
    %c0_9 = arith.constant 0 : index
    %c0_10 = arith.constant 0 : index
    %7 = vector.load %arg6[%c0_9, %c0_10] : memref<1x256xf32, #tpu.memory_space<vmem>>, vector<1x256xf32>
    %c0_11 = arith.constant 0 : index
    %c0_12 = arith.constant 0 : index
    %8 = vector.load %arg7[%c0_11, %c0_12] : memref<1x1xf32, #tpu.memory_space<vmem>>, vector<1x1xf32>
    %c0_13 = arith.constant 0 : index
    %c0_14 = arith.constant 0 : index
    %9 = vector.load %arg8[%c0_13, %c0_14] : memref<1x256xf32, #tpu.memory_space<vmem>>, vector<1x256xf32>
    %c0_15 = arith.constant 0 : index
    %c0_16 = arith.constant 0 : index
    %10 = vector.load %arg9[%c0_15, %c0_16] : memref<1x256xf32, #tpu.memory_space<vmem>>, vector<1x256xf32>
    %c0_17 = arith.constant 0 : index
    %c0_18 = arith.constant 0 : index
    %c0_19 = arith.constant 0 : index
    %11 = vector.load %arg1[%c0_17, %c0_18, %c0_19] : memref<2x16x256xf32, #tpu.memory_space<vmem>>, vector<1x16x256xf32>
    %12 = vector.shape_cast %11 : vector<1x16x256xf32> to vector<16x256xf32>
    %13 = arith.truncf %12 : vector<16x256xf32> to vector<16x256xbf16>
    %14 = arith.extf %13 : vector<16x256xbf16> to vector<16x256xf32>
    %15 = arith.subf %12, %14 : vector<16x256xf32>
    %16 = arith.truncf %15 : vector<16x256xf32> to vector<16x256xbf16>
    %cst = arith.constant dense<0.000000e+00> : vector<16x256xf32>
    %17 = tpu.matmul %13, %2, %cst {dimension_numbers = #tpu.dot_dimension_numbers<[1], [0], [0], [1], [0, 0, 1, 1], [], []>} : vector<16x256xbf16>, vector<256x256xbf16>, vector<16x256xf32> -> vector<16x256xf32>
    %cst_20 = arith.constant dense<0.000000e+00> : vector<16x256xf32>
    %18 = tpu.matmul %16, %2, %cst_20 {dimension_numbers = #tpu.dot_dimension_numbers<[1], [0], [0], [1], [0, 0, 1, 1], [], []>} : vector<16x256xbf16>, vector<256x256xbf16>, vector<16x256xf32> -> vector<16x256xf32>
    %19 = arith.addf %17, %18 : vector<16x256xf32>
    %20 = arith.subf %12, %19 : vector<16x256xf32>
    %21 = arith.mulf %20, %20 : vector<16x256xf32>
    %22 = arith.truncf %21 : vector<16x256xf32> to vector<16x256xbf16>
    %23 = arith.extf %22 : vector<16x256xbf16> to vector<16x256xf32>
    %24 = arith.subf %21, %23 : vector<16x256xf32>
    %25 = arith.truncf %24 : vector<16x256xf32> to vector<16x256xbf16>
    %cst_21 = arith.constant dense<0.000000e+00> : vector<16x256xf32>
    %26 = tpu.matmul %22, %2, %cst_21 {dimension_numbers = #tpu.dot_dimension_numbers<[1], [0], [0], [1], [0, 0, 1, 1], [], []>} : vector<16x256xbf16>, vector<256x256xbf16>, vector<16x256xf32> -> vector<16x256xf32>
    %cst_22 = arith.constant dense<0.000000e+00> : vector<16x256xf32>
    %27 = tpu.matmul %25, %2, %cst_22 {dimension_numbers = #tpu.dot_dimension_numbers<[1], [0], [0], [1], [0, 0, 1, 1], [], []>} : vector<16x256xbf16>, vector<256x256xbf16>, vector<16x256xf32> -> vector<16x256xf32>
    %28 = arith.addf %26, %27 : vector<16x256xf32>
    %cst_23 = arith.constant 9.99999974E-6 : f32
    %29 = vector.broadcast %cst_23 : f32 to vector<16x256xf32>
    %30 = arith.addf %28, %29 : vector<16x256xf32>
    %31 = math.rsqrt %30 : vector<16x256xf32>
    %32 = arith.mulf %20, %31 : vector<16x256xf32>
    %33 = vector.broadcast %3 : vector<1x256xf32> to vector<16x256xf32>
    %34 = arith.mulf %32, %33 : vector<16x256xf32>
    %35 = vector.broadcast %4 : vector<1x256xf32> to vector<16x256xf32>
    %36 = arith.addf %34, %35 : vector<16x256xf32>
    %cst_24 = arith.constant dense<0.000000e+00> : vector<256xf32>
    %37 = vector.multi_reduction <add>, %36, %cst_24 [0] : vector<16x256xf32> to vector<256xf32>
    %38 = vector.shape_cast %37 : vector<256xf32> to vector<1x256xf32>
    %39 = arith.mulf %7, %38 : vector<1x256xf32>
    %cst_25 = arith.constant dense<0.000000e+00> : vector<1xf32>
    %40 = vector.multi_reduction <add>, %39, %cst_25 [1] : vector<1x256xf32> to vector<1xf32>
    %41 = vector.shape_cast %40 : vector<1xf32> to vector<1x1xf32>
    %42 = arith.addf %41, %8 : vector<1x1xf32>
    %cst_26 = arith.constant 0.000000e+00 : f32
    %43 = vector.broadcast %cst_26 : f32 to vector<1x1xf32>
    %44 = arith.maximumf %42, %43 : vector<1x1xf32>
    %45 = vector.broadcast %44 : vector<1x1xf32> to vector<1x256xf32>
    %46 = arith.mulf %9, %45 : vector<1x256xf32>
    %cst_27 = arith.constant dense<0.000000e+00> : vector<256xf32>
    %47 = vector.multi_reduction <add>, %46, %cst_27 [0] : vector<1x256xf32> to vector<256xf32>
    %48 = vector.shape_cast %47 : vector<256xf32> to vector<1x256xf32>
    %49 = arith.addf %48, %10 : vector<1x256xf32>
    %50 = math.tanh %49 : vector<1x256xf32>
    %51 = vector.broadcast %50 : vector<1x256xf32> to vector<16x256xf32>
    %52 = arith.mulf %36, %51 : vector<16x256xf32>
    %c16_i32 = arith.constant 16 : i32
    %53 = vector.broadcast %c16_i32 : i32 to vector<1x256xi32>
    %54 = arith.cmpi sge, %0, %53 : vector<1x256xi32>
    %c16_i32_28 = arith.constant 16 : i32
    %55 = tpu.dynamic_rotate %36 by %c16_i32_28 dim 1 : vector<16x256xf32>, i32 -> vector<16x256xf32>
    %cst_29 = arith.constant 0.000000e+00 : f32
    %56 = vector.shape_cast %54 : vector<1x256xi1> to vector<1x256xi1>
    %57 = vector.broadcast %56 : vector<1x256xi1> to vector<16x256xi1>
    %58 = vector.broadcast %cst_29 : f32 to vector<16x256xf32>
    %59 = arith.select %57, %55, %58 : vector<16x256xi1>, vector<16x256xf32>
    %c240_i32 = arith.constant 240 : i32
    %60 = vector.broadcast %c240_i32 : i32 to vector<1x256xi32>
    %61 = arith.cmpi slt, %0, %60 : vector<1x256xi32>
    %c240_i32_30 = arith.constant 240 : i32
    %62 = tpu.dynamic_rotate %36 by %c240_i32_30 dim 1 : vector<16x256xf32>, i32 -> vector<16x256xf32>
    %cst_31 = arith.constant 0.000000e+00 : f32
    %63 = vector.shape_cast %61 : vector<1x256xi1> to vector<1x256xi1>
    %64 = vector.broadcast %63 : vector<1x256xi1> to vector<16x256xi1>
    %65 = vector.broadcast %cst_31 : f32 to vector<16x256xf32>
    %66 = arith.select %64, %62, %65 : vector<16x256xi1>, vector<16x256xf32>
    %67 = vector.extract_strided_slice %5 {offsets = [0, 0], sizes = [1, 256], strides = [1, 1]} : vector<9x256xf32> to vector<1x256xf32>
    %68 = vector.broadcast %67 : vector<1x256xf32> to vector<16x256xf32>
    %69 = arith.mulf %59, %68 : vector<16x256xf32>
    %70 = vector.extract_strided_slice %5 {offsets = [1, 0], sizes = [1, 256], strides = [1, 1]} : vector<9x256xf32> to vector<1x256xf32>
    %71 = vector.broadcast %70 : vector<1x256xf32> to vector<16x256xf32>
    %72 = arith.mulf %36, %71 : vector<16x256xf32>
    %73 = arith.addf %69, %72 : vector<16x256xf32>
    %74 = vector.extract_strided_slice %5 {offsets = [2, 0], sizes = [1, 256], strides = [1, 1]} : vector<9x256xf32> to vector<1x256xf32>
    %75 = vector.broadcast %74 : vector<1x256xf32> to vector<16x256xf32>
    %76 = arith.mulf %66, %75 : vector<16x256xf32>
    %77 = arith.addf %73, %76 : vector<16x256xf32>
    %78 = vector.extract_strided_slice %5 {offsets = [3, 0], sizes = [1, 256], strides = [1, 1]} : vector<9x256xf32> to vector<1x256xf32>
    %79 = vector.broadcast %78 : vector<1x256xf32> to vector<16x256xf32>
    %80 = arith.mulf %59, %79 : vector<16x256xf32>
    %81 = vector.extract_strided_slice %5 {offsets = [4, 0], sizes = [1, 256], strides = [1, 1]} : vector<9x256xf32> to vector<1x256xf32>
    %82 = vector.broadcast %81 : vector<1x256xf32> to vector<16x256xf32>
    %83 = arith.mulf %36, %82 : vector<16x256xf32>
    %84 = arith.addf %80, %83 : vector<16x256xf32>
    %85 = vector.extract_strided_slice %5 {offsets = [5, 0], sizes = [1, 256], strides = [1, 1]} : vector<9x256xf32> to vector<1x256xf32>
    %86 = vector.broadcast %85 : vector<1x256xf32> to vector<16x256xf32>
    %87 = arith.mulf %66, %86 : vector<16x256xf32>
    %88 = arith.addf %84, %87 : vector<16x256xf32>
    %89 = vector.extract_strided_slice %5 {offsets = [6, 0], sizes = [1, 256], strides = [1, 1]} : vector<9x256xf32> to vector<1x256xf32>
    %90 = vector.broadcast %89 : vector<1x256xf32> to vector<16x256xf32>
    %91 = arith.mulf %59, %90 : vector<16x256xf32>
    %92 = vector.extract_strided_slice %5 {offsets = [7, 0], sizes = [1, 256], strides = [1, 1]} : vector<9x256xf32> to vector<1x256xf32>
    %93 = vector.broadcast %92 : vector<1x256xf32> to vector<16x256xf32>
    %94 = arith.mulf %36, %93 : vector<16x256xf32>
    %95 = arith.addf %91, %94 : vector<16x256xf32>
    %96 = vector.extract_strided_slice %5 {offsets = [8, 0], sizes = [1, 256], strides = [1, 1]} : vector<9x256xf32> to vector<1x256xf32>
    %97 = vector.broadcast %96 : vector<1x256xf32> to vector<16x256xf32>
    %98 = arith.mulf %66, %97 : vector<16x256xf32>
    %99 = arith.addf %95, %98 : vector<16x256xf32>
    %c1_i32 = arith.constant 1 : i32
    %100 = vector.broadcast %c1_i32 : i32 to vector<16x1xi32>
    %101 = arith.cmpi sge, %1, %100 : vector<16x1xi32>
    %c1_i32_32 = arith.constant 1 : i32
    %102 = tpu.dynamic_rotate %77 by %c1_i32_32 dim 0 : vector<16x256xf32>, i32 -> vector<16x256xf32>
    %cst_33 = arith.constant 0.000000e+00 : f32
    %103 = vector.shape_cast %101 : vector<16x1xi1> to vector<16x1xi1>
    %104 = vector.broadcast %103 : vector<16x1xi1> to vector<16x256xi1>
    %105 = vector.broadcast %cst_33 : f32 to vector<16x256xf32>
    %106 = arith.select %104, %102, %105 : vector<16x256xi1>, vector<16x256xf32>
    %107 = arith.addf %88, %106 : vector<16x256xf32>
    %c14_i32 = arith.constant 14 : i32
    %108 = vector.broadcast %c14_i32 : i32 to vector<16x1xi32>
    %109 = arith.cmpi sle, %1, %108 : vector<16x1xi32>
    %c15_i32 = arith.constant 15 : i32
    %110 = tpu.dynamic_rotate %99 by %c15_i32 dim 0 : vector<16x256xf32>, i32 -> vector<16x256xf32>
    %cst_34 = arith.constant 0.000000e+00 : f32
    %111 = vector.shape_cast %109 : vector<16x1xi1> to vector<16x1xi1>
    %112 = vector.broadcast %111 : vector<16x1xi1> to vector<16x256xi1>
    %113 = vector.broadcast %cst_34 : f32 to vector<16x256xf32>
    %114 = arith.select %112, %110, %113 : vector<16x256xi1>, vector<16x256xf32>
    %115 = arith.addf %107, %114 : vector<16x256xf32>
    %116 = vector.broadcast %6 : vector<1x256xf32> to vector<16x256xf32>
    %117 = arith.addf %115, %116 : vector<16x256xf32>
    %118 = arith.mulf %117, %52 : vector<16x256xf32>
    %c0_35 = arith.constant 0 : index
    %c0_36 = arith.constant 0 : index
    %c0_37 = arith.constant 0 : index
    %119 = vector.load %arg1[%c0_35, %c0_36, %c0_37] : memref<2x16x256xf32, #tpu.memory_space<vmem>>, vector<1x16x256xf32>
    %120 = vector.shape_cast %119 : vector<1x16x256xf32> to vector<16x256xf32>
    %121 = arith.addf %118, %120 : vector<16x256xf32>
    %c0_38 = arith.constant 0 : index
    %c0_39 = arith.constant 0 : index
    %c0_40 = arith.constant 0 : index
    %122 = vector.load %arg11[%c0_38, %c0_39, %c0_40] : memref<2x16x256xf32, #tpu.memory_space<vmem>>, vector<1x16x256xf32>
    %123 = vector.shape_cast %122 : vector<1x16x256xf32> to vector<16x256xf32>
    %124 = vector.shape_cast %121 : vector<16x256xf32> to vector<1x16x256xf32>
    tpu.vector_store %arg11[%c0_38, %c0_39, %c0_40], %124 {strides = array<i32>} : memref<2x16x256xf32, #tpu.memory_space<vmem>>, vector<1x16x256xf32>,
    %c1 = arith.constant 1 : index
    %c0_41 = arith.constant 0 : index
    %c0_42 = arith.constant 0 : index
    %125 = vector.load %arg1[%c1, %c0_41, %c0_42] : memref<2x16x256xf32, #tpu.memory_space<vmem>>, vector<1x16x256xf32>
    %126 = vector.shape_cast %125 : vector<1x16x256xf32> to vector<16x256xf32>
    %127 = arith.truncf %126 : vector<16x256xf32> to vector<16x256xbf16>
    %128 = arith.extf %127 : vector<16x256xbf16> to vector<16x256xf32>
    %129 = arith.subf %126, %128 : vector<16x256xf32>
    %130 = arith.truncf %129 : vector<16x256xf32> to vector<16x256xbf16>
    %cst_43 = arith.constant dense<0.000000e+00> : vector<16x256xf32>
    %131 = tpu.matmul %127, %2, %cst_43 {dimension_numbers = #tpu.dot_dimension_numbers<[1], [0], [0], [1], [0, 0, 1, 1], [], []>} : vector<16x256xbf16>, vector<256x256xbf16>, vector<16x256xf32> -> vector<16x256xf32>
    %cst_44 = arith.constant dense<0.000000e+00> : vector<16x256xf32>
    %132 = tpu.matmul %130, %2, %cst_44 {dimension_numbers = #tpu.dot_dimension_numbers<[1], [0], [0], [1], [0, 0, 1, 1], [], []>} : vector<16x256xbf16>, vector<256x256xbf16>, vector<16x256xf32> -> vector<16x256xf32>
    %133 = arith.addf %131, %132 : vector<16x256xf32>
    %134 = arith.subf %126, %133 : vector<16x256xf32>
    %135 = arith.mulf %134, %134 : vector<16x256xf32>
    %136 = arith.truncf %135 : vector<16x256xf32> to vector<16x256xbf16>
    %137 = arith.extf %136 : vector<16x256xbf16> to vector<16x256xf32>
    %138 = arith.subf %135, %137 : vector<16x256xf32>
    %139 = arith.truncf %138 : vector<16x256xf32> to vector<16x256xbf16>
    %cst_45 = arith.constant dense<0.000000e+00> : vector<16x256xf32>
    %140 = tpu.matmul %136, %2, %cst_45 {dimension_numbers = #tpu.dot_dimension_numbers<[1], [0], [0], [1], [0, 0, 1, 1], [], []>} : vector<16x256xbf16>, vector<256x256xbf16>, vector<16x256xf32> -> vector<16x256xf32>
    %cst_46 = arith.constant dense<0.000000e+00> : vector<16x256xf32>
    %141 = tpu.matmul %139, %2, %cst_46 {dimension_numbers = #tpu.dot_dimension_numbers<[1], [0], [0], [1], [0, 0, 1, 1], [], []>} : vector<16x256xbf16>, vector<256x256xbf16>, vector<16x256xf32> -> vector<16x256xf32>
    %142 = arith.addf %140, %141 : vector<16x256xf32>
    %cst_47 = arith.constant 9.99999974E-6 : f32
    %143 = vector.broadcast %cst_47 : f32 to vector<16x256xf32>
    %144 = arith.addf %142, %143 : vector<16x256xf32>
    %145 = math.rsqrt %144 : vector<16x256xf32>
    %146 = arith.mulf %134, %145 : vector<16x256xf32>
    %147 = vector.broadcast %3 : vector<1x256xf32> to vector<16x256xf32>
    %148 = arith.mulf %146, %147 : vector<16x256xf32>
    %149 = vector.broadcast %4 : vector<1x256xf32> to vector<16x256xf32>
    %150 = arith.addf %148, %149 : vector<16x256xf32>
    %cst_48 = arith.constant dense<0.000000e+00> : vector<256xf32>
    %151 = vector.multi_reduction <add>, %150, %cst_48 [0] : vector<16x256xf32> to vector<256xf32>
    %152 = vector.shape_cast %151 : vector<256xf32> to vector<1x256xf32>
    %153 = arith.mulf %7, %152 : vector<1x256xf32>
    %cst_49 = arith.constant dense<0.000000e+00> : vector<1xf32>
    %154 = vector.multi_reduction <add>, %153, %cst_49 [1] : vector<1x256xf32> to vector<1xf32>
    %155 = vector.shape_cast %154 : vector<1xf32> to vector<1x1xf32>
    %156 = arith.addf %155, %8 : vector<1x1xf32>
    %cst_50 = arith.constant 0.000000e+00 : f32
    %157 = vector.broadcast %cst_50 : f32 to vector<1x1xf32>
    %158 = arith.maximumf %156, %157 : vector<1x1xf32>
    %159 = vector.broadcast %158 : vector<1x1xf32> to vector<1x256xf32>
    %160 = arith.mulf %9, %159 : vector<1x256xf32>
    %cst_51 = arith.constant dense<0.000000e+00> : vector<256xf32>
    %161 = vector.multi_reduction <add>, %160, %cst_51 [0] : vector<1x256xf32> to vector<256xf32>
    %162 = vector.shape_cast %161 : vector<256xf32> to vector<1x256xf32>
    %163 = arith.addf %162, %10 : vector<1x256xf32>
    %164 = math.tanh %163 : vector<1x256xf32>
    %165 = vector.broadcast %164 : vector<1x256xf32> to vector<16x256xf32>
    %166 = arith.mulf %150, %165 : vector<16x256xf32>
    %c16_i32_52 = arith.constant 16 : i32
    %167 = vector.broadcast %c16_i32_52 : i32 to vector<1x256xi32>
    %168 = arith.cmpi sge, %0, %167 : vector<1x256xi32>
    %c16_i32_53 = arith.constant 16 : i32
    %169 = tpu.dynamic_rotate %150 by %c16_i32_53 dim 1 : vector<16x256xf32>, i32 -> vector<16x256xf32>
    %cst_54 = arith.constant 0.000000e+00 : f32
    %170 = vector.shape_cast %168 : vector<1x256xi1> to vector<1x256xi1>
    %171 = vector.broadcast %170 : vector<1x256xi1> to vector<16x256xi1>
    %172 = vector.broadcast %cst_54 : f32 to vector<16x256xf32>
    %173 = arith.select %171, %169, %172 : vector<16x256xi1>, vector<16x256xf32>
    %c240_i32_55 = arith.constant 240 : i32
    %174 = vector.broadcast %c240_i32_55 : i32 to vector<1x256xi32>
    %175 = arith.cmpi slt, %0, %174 : vector<1x256xi32>
    %c240_i32_56 = arith.constant 240 : i32
    %176 = tpu.dynamic_rotate %150 by %c240_i32_56 dim 1 : vector<16x256xf32>, i32 -> vector<16x256xf32>
    %cst_57 = arith.constant 0.000000e+00 : f32
    %177 = vector.shape_cast %175 : vector<1x256xi1> to vector<1x256xi1>
    %178 = vector.broadcast %177 : vector<1x256xi1> to vector<16x256xi1>
    %179 = vector.broadcast %cst_57 : f32 to vector<16x256xf32>
    %180 = arith.select %178, %176, %179 : vector<16x256xi1>, vector<16x256xf32>
    %181 = vector.extract_strided_slice %5 {offsets = [0, 0], sizes = [1, 256], strides = [1, 1]} : vector<9x256xf32> to vector<1x256xf32>
    %182 = vector.broadcast %181 : vector<1x256xf32> to vector<16x256xf32>
    %183 = arith.mulf %173, %182 : vector<16x256xf32>
    %184 = vector.extract_strided_slice %5 {offsets = [1, 0], sizes = [1, 256], strides = [1, 1]} : vector<9x256xf32> to vector<1x256xf32>
    %185 = vector.broadcast %184 : vector<1x256xf32> to vector<16x256xf32>
    %186 = arith.mulf %150, %185 : vector<16x256xf32>
    %187 = arith.addf %183, %186 : vector<16x256xf32>
    %188 = vector.extract_strided_slice %5 {offsets = [2, 0], sizes = [1, 256], strides = [1, 1]} : vector<9x256xf32> to vector<1x256xf32>
    %189 = vector.broadcast %188 : vector<1x256xf32> to vector<16x256xf32>
    %190 = arith.mulf %180, %189 : vector<16x256xf32>
    %191 = arith.addf %187, %190 : vector<16x256xf32>
    %192 = vector.extract_strided_slice %5 {offsets = [3, 0], sizes = [1, 256], strides = [1, 1]} : vector<9x256xf32> to vector<1x256xf32>
    %193 = vector.broadcast %192 : vector<1x256xf32> to vector<16x256xf32>
    %194 = arith.mulf %173, %193 : vector<16x256xf32>
    %195 = vector.extract_strided_slice %5 {offsets = [4, 0], sizes = [1, 256], strides = [1, 1]} : vector<9x256xf32> to vector<1x256xf32>
    %196 = vector.broadcast %195 : vector<1x256xf32> to vector<16x256xf32>
    %197 = arith.mulf %150, %196 : vector<16x256xf32>
    %198 = arith.addf %194, %197 : vector<16x256xf32>
    %199 = vector.extract_strided_slice %5 {offsets = [5, 0], sizes = [1, 256], strides = [1, 1]} : vector<9x256xf32> to vector<1x256xf32>
    %200 = vector.broadcast %199 : vector<1x256xf32> to vector<16x256xf32>
    %201 = arith.mulf %180, %200 : vector<16x256xf32>
    %202 = arith.addf %198, %201 : vector<16x256xf32>
    %203 = vector.extract_strided_slice %5 {offsets = [6, 0], sizes = [1, 256], strides = [1, 1]} : vector<9x256xf32> to vector<1x256xf32>
    %204 = vector.broadcast %203 : vector<1x256xf32> to vector<16x256xf32>
    %205 = arith.mulf %173, %204 : vector<16x256xf32>
    %206 = vector.extract_strided_slice %5 {offsets = [7, 0], sizes = [1, 256], strides = [1, 1]} : vector<9x256xf32> to vector<1x256xf32>
    %207 = vector.broadcast %206 : vector<1x256xf32> to vector<16x256xf32>
    %208 = arith.mulf %150, %207 : vector<16x256xf32>
    %209 = arith.addf %205, %208 : vector<16x256xf32>
    %210 = vector.extract_strided_slice %5 {offsets = [8, 0], sizes = [1, 256], strides = [1, 1]} : vector<9x256xf32> to vector<1x256xf32>
    %211 = vector.broadcast %210 : vector<1x256xf32> to vector<16x256xf32>
    %212 = arith.mulf %180, %211 : vector<16x256xf32>
    %213 = arith.addf %209, %212 : vector<16x256xf32>
    %c1_i32_58 = arith.constant 1 : i32
    %214 = vector.broadcast %c1_i32_58 : i32 to vector<16x1xi32>
    %215 = arith.cmpi sge, %1, %214 : vector<16x1xi32>
    %c1_i32_59 = arith.constant 1 : i32
    %216 = tpu.dynamic_rotate %191 by %c1_i32_59 dim 0 : vector<16x256xf32>, i32 -> vector<16x256xf32>
    %cst_60 = arith.constant 0.000000e+00 : f32
    %217 = vector.shape_cast %215 : vector<16x1xi1> to vector<16x1xi1>
    %218 = vector.broadcast %217 : vector<16x1xi1> to vector<16x256xi1>
    %219 = vector.broadcast %cst_60 : f32 to vector<16x256xf32>
    %220 = arith.select %218, %216, %219 : vector<16x256xi1>, vector<16x256xf32>
    %221 = arith.addf %202, %220 : vector<16x256xf32>
    %c14_i32_61 = arith.constant 14 : i32
    %222 = vector.broadcast %c14_i32_61 : i32 to vector<16x1xi32>
    %223 = arith.cmpi sle, %1, %222 : vector<16x1xi32>
    %c15_i32_62 = arith.constant 15 : i32
    %224 = tpu.dynamic_rotate %213 by %c15_i32_62 dim 0 : vector<16x256xf32>, i32 -> vector<16x256xf32>
    %cst_63 = arith.constant 0.000000e+00 : f32
    %225 = vector.shape_cast %223 : vector<16x1xi1> to vector<16x1xi1>
    %226 = vector.broadcast %225 : vector<16x1xi1> to vector<16x256xi1>
    %227 = vector.broadcast %cst_63 : f32 to vector<16x256xf32>
    %228 = arith.select %226, %224, %227 : vector<16x256xi1>, vector<16x256xf32>
    %229 = arith.addf %221, %228 : vector<16x256xf32>
    %230 = vector.broadcast %6 : vector<1x256xf32> to vector<16x256xf32>
    %231 = arith.addf %229, %230 : vector<16x256xf32>
    %232 = arith.mulf %231, %166 : vector<16x256xf32>
    %c1_64 = arith.constant 1 : index
    %c0_65 = arith.constant 0 : index
    %c0_66 = arith.constant 0 : index
    %233 = vector.load %arg1[%c1_64, %c0_65, %c0_66] : memref<2x16x256xf32, #tpu.memory_space<vmem>>, vector<1x16x256xf32>
    %234 = vector.shape_cast %233 : vector<1x16x256xf32> to vector<16x256xf32>
    %235 = arith.addf %232, %234 : vector<16x256xf32>
    %c1_67 = arith.constant 1 : index
    %c0_68 = arith.constant 0 : index
    %c0_69 = arith.constant 0 : index
    %236 = vector.load %arg11[%c1_67, %c0_68, %c0_69] : memref<2x16x256xf32, #tpu.memory_space<vmem>>, vector<1x16x256xf32>
    %237 = vector.shape_cast %236 : vector<1x16x256xf32> to vector<16x256xf32>
    %238 = vector.shape_cast %235 : vector<16x256xf32> to vector<1x16x256xf32>
    tpu.vector_store %arg11[%c1_67, %c0_68, %c0_69], %238 {strides = array<i32>} : memref<2x16x256xf32, #tpu.memory_space<vmem>>, vector<1x16x256xf32>,
    return
  }
  func.func @transform_0(%arg0: i32) -> (i32, i32, i32) {
    %c0_i32 = arith.constant 0 : i32
    %c0_i32_0 = arith.constant 0 : i32
    %c0_i32_1 = arith.constant 0 : i32
    return %arg0, %c0_i32, %c0_i32_0 : i32, i32, i32
  }
  func.func @transform_1(%arg0: i32) -> (i32, i32) {
    %c0_i32 = arith.constant 0 : i32
    %c0_i32_0 = arith.constant 0 : i32
    %c0_i32_1 = arith.constant 0 : i32
    return %c0_i32, %c0_i32_0 : i32, i32
  }
  func.func @transform_2(%arg0: i32) -> (i32, i32) {
    %c0_i32 = arith.constant 0 : i32
    %c0_i32_0 = arith.constant 0 : i32
    %c0_i32_1 = arith.constant 0 : i32
    return %c0_i32, %c0_i32_0 : i32, i32
  }
  func.func @transform_3(%arg0: i32) -> (i32, i32) {
    %c0_i32 = arith.constant 0 : i32
    %c0_i32_0 = arith.constant 0 : i32
    %c0_i32_1 = arith.constant 0 : i32
    return %c0_i32, %c0_i32_0 : i32, i32
  }
  func.func @transform_4(%arg0: i32) -> (i32, i32) {
    %c0_i32 = arith.constant 0 : i32
    %c0_i32_0 = arith.constant 0 : i32
    %c0_i32_1 = arith.constant 0 : i32
    return %c0_i32, %c0_i32_0 : i32, i32
  }
  func.func @transform_5(%arg0: i32) -> (i32, i32) {
    %c0_i32 = arith.constant 0 : i32
    %c0_i32_0 = arith.constant 0 : i32
    %c0_i32_1 = arith.constant 0 : i32
    return %c0_i32, %c0_i32_0 : i32, i32
  }
  func.func @transform_6(%arg0: i32) -> (i32, i32) {
    %c0_i32 = arith.constant 0 : i32
    %c0_i32_0 = arith.constant 0 : i32
    %c0_i32_1 = arith.constant 0 : i32
    return %c0_i32, %c0_i32_0 : i32, i32
  }
  func.func @transform_7(%arg0: i32) -> (i32, i32) {
    %c0_i32 = arith.constant 0 : i32
    %c0_i32_0 = arith.constant 0 : i32
    %c0_i32_1 = arith.constant 0 : i32
    return %c0_i32, %c0_i32_0 : i32, i32
  }
  func.func @transform_8(%arg0: i32) -> (i32, i32) {
    %c0_i32 = arith.constant 0 : i32
    %c0_i32_0 = arith.constant 0 : i32
    %c0_i32_1 = arith.constant 0 : i32
    return %c0_i32, %c0_i32_0 : i32, i32
  }
  func.func @transform_9(%arg0: i32) -> (i32, i32) {
    %c0_i32 = arith.constant 0 : i32
    %c0_i32_0 = arith.constant 0 : i32
    %c0_i32_1 = arith.constant 0 : i32
    return %c0_i32, %c0_i32_0 : i32, i32
  }
  func.func @transform_10(%arg0: i32) -> (i32, i32, i32) {
    %c0_i32 = arith.constant 0 : i32
    %c0_i32_0 = arith.constant 0 : i32
    %c0_i32_1 = arith.constant 0 : i32
    return %arg0, %c0_i32, %c0_i32_0 : i32, i32, i32
  }
}

</mosaic_0001>

<llo_original>
// kernel: tpu_custom_call.1
$region0: #{tpu_custom_call.1}
  #allocation0 [shape = 'u32[]', space=smem, size = 0x4, offset = 0x4, fixed_abs, tag = 'smem constant byte address 0x4 - core index']
  #allocation1 [shape = 'u32[144,128]{1,0:T(1,128)}', space=vmem, size = 0x12000, scoped, tag = 'internal scratch']
  #allocation2 [shape = 'f32[1,1]{1,0:T(1,128)S(1)}', space=vmem, size = 0x200, scoped, tag = 'scoped memory for tpu_custom_call.1']
  %s0 = inlined_call_operand.hbm [shape: f32[2,16,256], index: 0, kind: input, shape index: {}, may-alias: {0,10}]
  %s1 = inlined_call_operand.vmem [shape: f32[1,256], index: 1, kind: input, shape index: {}]
  %s2 = inlined_call_operand.vmem [shape: f32[1,256], index: 2, kind: input, shape index: {}]
  %s3 = inlined_call_operand.vmem [shape: f32[9,256], index: 3, kind: input, shape index: {}]
  %s4 = inlined_call_operand.vmem [shape: f32[1,256], index: 4, kind: input, shape index: {}]
  %s5 = inlined_call_operand.vmem [shape: f32[1,256], index: 5, kind: input, shape index: {}]
  %s6 = inlined_call_operand.<no memory space> [shape: f32[1,1], index: 6, kind: input, shape index: {}]
  %s7 = inlined_call_operand.vmem [shape: f32[1,256], index: 7, kind: input, shape index: {}]
  %s8 = inlined_call_operand.vmem [shape: f32[1,256], index: 8, kind: input, shape index: {}]
  %s9 = inlined_call_operand.hbm [shape: bf16[256,256], index: 9, kind: input, shape index: {}]
  %s10 = inlined_call_operand.hbm [shape: f32[2,16,256], index: 10, kind: output, shape index: {}, may-alias: {0,10}]
  %s11 = sld [smem:[#allocation0]]
  $region58: #{tpu_custom_call.1} parent=0
    _
  %s13 = ssub.s32 1, %s11
  %s14 = scalar_select 0, %s13, %s11
  %v15 = vstv %s6
  %16 = vst [vmem:[#allocation2] sm:$0x1] %v15
  $region1: #{tpu_custom_call.1} parent=0
    #allocation3 [shape = 'u8[32768]{0}', space=vmem, size = 0x8000, scoped, tag = 'input window, operand 0, single buffered']
    #allocation4 [shape = 's32[1]{0}', space=sflag, size = 0x4, scoped, tag = 'scoped memory for tpu_custom_call.1']
    #allocation5 [shape = 's32[1]{0}', space=sflag, size = 0x4, scoped, tag = 'scoped memory for tpu_custom_call.1']
    #allocation6 [shape = 'u8[131072]{0}', space=vmem, size = 0x20000, scoped, tag = 'input window, operand 9, single buffered']
    #allocation7 [shape = 's32[1]{0}', space=sflag, size = 0x4, scoped, tag = 'scoped memory for tpu_custom_call.1']
    #allocation8 [shape = 'u8[32768]{0}', space=vmem, size = 0x8000, scoped, tag = 'output window, operand 0, single buffered']
    %17 = vsyncpa [#allocation4], 0
    %18 = vsyncpa [#allocation7], 0
    %19 = vsyncpa [#allocation5], 0
    // Predicated region
    $region2: #{tpu_custom_call.1} parent=1 // pred_check
      _
    $region3: #{tpu_custom_call.1} parent=1 // pred_check_branch
      %21 = sbr.rel (0) target = $region5
    $region4: #{tpu_custom_call.1} parent=1 // pred_region
      %s23 = ssub.s32 1024, 1024
      %24 = vsyncadd [#allocation4], %s23
      %s25 = sshll.u32 [#allocation3], 4
      %s26 = int_to_ptr.vmem [resolvable:$true] %s25
      %31 = dma.hbm_to_vmem [thread:$0]  %s0, 1024, %s26, [#allocation4], 256, 256, 16
    $region5: #{tpu_custom_call.1} parent=1 // pred_fallthru
      _
    // Predicated region
    $region6: #{tpu_custom_call.1} parent=1 // pred_check
      _
    $region7: #{tpu_custom_call.1} parent=1 // pred_check_branch
      %33 = sbr.rel (0) target = $region9
    $region8: #{tpu_custom_call.1} parent=1 // pred_region
      _
    $region9: #{tpu_custom_call.1} parent=1 // pred_fallthru
      _
    // Predicated region
    $region10: #{tpu_custom_call.1} parent=1 // pred_check
      _
    $region11: #{tpu_custom_call.1} parent=1 // pred_check_branch
      %35 = sbr.rel (0) target = $region13
    $region12: #{tpu_custom_call.1} parent=1 // pred_region
      _
    $region13: #{tpu_custom_call.1} parent=1 // pred_fallthru
      _
    // Predicated region
    $region14: #{tpu_custom_call.1} parent=1 // pred_check
      _
    $region15: #{tpu_custom_call.1} parent=1 // pred_check_branch
      %37 = sbr.rel (0) target = $region17
    $region16: #{tpu_custom_call.1} parent=1 // pred_region
      _
    $region17: #{tpu_custom_call.1} parent=1 // pred_fallthru
      _
    // Predicated region
    $region18: #{tpu_custom_call.1} parent=1 // pred_check
      _
    $region19: #{tpu_custom_call.1} parent=1 // pred_check_branch
      %39 = sbr.rel (0) target = $region21
    $region20: #{tpu_custom_call.1} parent=1 // pred_region
      _
    $region21: #{tpu_custom_call.1} parent=1 // pred_fallthru
      _
    // Predicated region
    $region22: #{tpu_custom_call.1} parent=1 // pred_check
      _
    $region23: #{tpu_custom_call.1} parent=1 // pred_check_branch
      %41 = sbr.rel (0) target = $region25
    $region24: #{tpu_custom_call.1} parent=1 // pred_region
      _
    $region25: #{tpu_custom_call.1} parent=1 // pred_fallthru
      _
    // Predicated region
    $region26: #{tpu_custom_call.1} parent=1 // pred_check
      _
    $region27: #{tpu_custom_call.1} parent=1 // pred_check_branch
      %43 = sbr.rel (0) target = $region29
    $region28: #{tpu_custom_call.1} parent=1 // pred_region
      _
    $region29: #{tpu_custom_call.1} parent=1 // pred_fallthru
      _
    // Predicated region
    $region30: #{tpu_custom_call.1} parent=1 // pred_check
      _
    $region31: #{tpu_custom_call.1} parent=1 // pred_check_branch
      %45 = sbr.rel (0) target = $region33
    $region32: #{tpu_custom_call.1} parent=1 // pred_region
      _
    $region33: #{tpu_custom_call.1} parent=1 // pred_fallthru
      _
    // Predicated region
    $region34: #{tpu_custom_call.1} parent=1 // pred_check
      _
    $region35: #{tpu_custom_call.1} parent=1 // pred_check_branch
      %47 = sbr.rel (0) target = $region37
    $region36: #{tpu_custom_call.1} parent=1 // pred_region
      _
    $region37: #{tpu_custom_call.1} parent=1 // pred_fallthru
      _
    // Predicated region
    $region38: #{tpu_custom_call.1} parent=1 // pred_check
      _
    $region39: #{tpu_custom_call.1} parent=1 // pred_check_branch
      %49 = sbr.rel (0) target = $region41
    $region40: #{tpu_custom_call.1} parent=1 // pred_region
      %s51 = ssub.s32 4096, 4096
      %52 = vsyncadd [#allocation7], %s51
      %s53 = sshll.u32 [#allocation6], 4
      %s54 = int_to_ptr.vmem [resolvable:$true] %s53
      %59 = dma.hbm_to_vmem [thread:$0]  %s9, 4096, %s54, [#allocation7], 128, 128, 8
    $region41: #{tpu_custom_call.1} parent=1 // pred_fallthru
      _
    // Predicated region
    $region42: #{tpu_custom_call.1} parent=1 // pred_check
      _
    $region43: #{tpu_custom_call.1} parent=1 // pred_check_branch
      %61 = sbr.rel (0) target = $region45
    $region44: #{tpu_custom_call.1} parent=1 // pred_region
      %62 = dma.done [#allocation4], 1024
    $region45: #{tpu_custom_call.1} parent=1 // pred_fallthru
      _
    // Predicated region
    $region46: #{tpu_custom_call.1} parent=1 // pred_check
      _
    $region47: #{tpu_custom_call.1} parent=1 // pred_check_branch
      %64 = sbr.rel (0) target = $region49
    $region48: #{tpu_custom_call.1} parent=1 // pred_region
      %65 = dma.done [#allocation7], 4096
    $region49: #{tpu_custom_call.1} parent=1 // pred_fallthru
      _
    %v66 = vlaneseq
    %v67 = vand.u32 %v66, 127
    %v68 = vadd.s32 %v67, 128
    %v69 = vlaneseq
    %v70 = vshrl.u32 %v69, 7
    %v71 = vadd.s32 %v70, 8
    %v72 = vld [vmem:[#allocation6] sm:$0xff]
    %v73 = vld [vmem:[#allocation6 + $0x8] sm:$0xff]
    %v74 = vld [vmem:[#allocation6 + $0x10] sm:$0xff]
    %v75 = vld [vmem:[#allocation6 + $0x18] sm:$0xff]
    %v76 = vld [vmem:[#allocation6 + $0x20] sm:$0xff]
    %v77 = vld [vmem:[#allocation6 + $0x28] sm:$0xff]
    %v78 = vld [vmem:[#allocation6 + $0x30] sm:$0xff]
    %v79 = vld [vmem:[#allocation6 + $0x38] sm:$0xff]
    %v80 = vld [vmem:[#allocation6 + $0x40] sm:$0xff]
    %v81 = vld [vmem:[#allocation6 + $0x48] sm:$0xff]
    %v82 = vld [vmem:[#allocation6 + $0x50] sm:$0xff]
    %v83 = vld [vmem:[#allocation6 + $0x58] sm:$0xff]
    %v84 = vld [vmem:[#allocation6 + $0x60] sm:$0xff]
    %v85 = vld [vmem:[#allocation6 + $0x68] sm:$0xff]
    %v86 = vld [vmem:[#allocation6 + $0x70] sm:$0xff]
    %v87 = vld [vmem:[#allocation6 + $0x78] sm:$0xff]
    %v88 = vld [vmem:[#allocation6 + $0x80] sm:$0xff]
    %v89 = vld [vmem:[#allocation6 + $0x88] sm:$0xff]
    %v90 = vld [vmem:[#allocation6 + $0x90] sm:$0xff]
    %v91 = vld [vmem:[#allocation6 + $0x98] sm:$0xff]
    %v92 = vld [vmem:[#allocation6 + $0xa0] sm:$0xff]
    %v93 = vld [vmem:[#allocation6 + $0xa8] sm:$0xff]
    %v94 = vld [vmem:[#allocation6 + $0xb0] sm:$0xff]
    %v95 = vld [vmem:[#allocation6 + $0xb8] sm:$0xff]
    %v96 = vld [vmem:[#allocation6 + $0xc0] sm:$0xff]
    %v97 = vld [vmem:[#allocation6 + $0xc8] sm:$0xff]
    %v98 = vld [vmem:[#allocation6 + $0xd0] sm:$0xff]
    %v99 = vld [vmem:[#allocation6 + $0xd8] sm:$0xff]
    %v100 = vld [vmem:[#allocation6 + $0xe0] sm:$0xff]
    %v101 = vld [vmem:[#allocation6 + $0xe8] sm:$0xff]
    %v102 = vld [vmem:[#allocation6 + $0xf0] sm:$0xff]
    %v103 = vld [vmem:[#allocation6 + $0xf8] sm:$0xff]
    %v104 = vld [vmem:[%s1] sm:$0x3]
    %v105 = vld [vmem:[%s2] sm:$0x3]
    %v106 = vld [vmem:[%s3] sm:$0xff]
    %v107 = vld [vmem:[%s3 + $0x8] sm:$0xff]
    %v108 = vld [vmem:[%s3 + $0x10] sm:$0x1]
    %v109 = vld [vmem:[%s3 + $0x18] sm:$0x1]
    %v110 = vld [vmem:[%s4] sm:$0x3]
    %v111 = vld [vmem:[%s5] sm:$0x3]
    %v112 = vld [vmem:[#allocation2] sm:$0x1]
    %v113 = vld [vmem:[%s7] sm:$0x3]
    %v114 = vld [vmem:[%s8] sm:$0x3]
    %v115 = vld [vmem:[#allocation3] sm:$0xff]
    %v116 = vld [vmem:[#allocation3 + $0x8] sm:$0xff]
    %v117 = vld [vmem:[#allocation3 + $0x10] sm:$0xff]
    %v118 = vld [vmem:[#allocation3 + $0x18] sm:$0xff]
    %v119 = vpack.c.bf16 %v117, %v115
    %v120 = vpack.c.bf16 %v118, %v116
    %v121 = vunpack.c.l.bf16 %v119
    %v122 = vunpack.c.l.bf16 %v120
    %v123 = vunpack.c.h.bf16 %v119
    %v124 = vunpack.c.h.bf16 %v120
    %v125 = vsub.f32 %v115, %v121
    %v126 = vsub.f32 %v116, %v122
    %v127 = vsub.f32 %v117, %v123
    %v128 = vsub.f32 %v118, %v124
    %v129 = vpack.c.bf16 %v127, %v125
    %v130 = vpack.c.bf16 %v128, %v126
    %v163 = vunpack.c.l.b16 %v72
    %v164 = vunpack.c.h.b16 %v72
    %v165 = vunpack.c.l.b16 %v73
    %v166 = vunpack.c.h.b16 %v73
    %v167 = vunpack.c.l.b16 %v74
    %v168 = vunpack.c.h.b16 %v74
    %v169 = vunpack.c.l.b16 %v75
    %v170 = vunpack.c.h.b16 %v75
    %v171 = vunpack.c.l.b16 %v76
    %v172 = vunpack.c.h.b16 %v76
    %v173 = vunpack.c.l.b16 %v77
    %v174 = vunpack.c.h.b16 %v77
    %v175 = vunpack.c.l.b16 %v78
    %v176 = vunpack.c.h.b16 %v78
    %v177 = vunpack.c.l.b16 %v79
    %v178 = vunpack.c.h.b16 %v79
    %v179 = vunpack.c.l.b16 %v80
    %v180 = vunpack.c.h.b16 %v80
    %v181 = vunpack.c.l.b16 %v81
    %v182 = vunpack.c.h.b16 %v81
    %v183 = vunpack.c.l.b16 %v82
    %v184 = vunpack.c.h.b16 %v82
    %v185 = vunpack.c.l.b16 %v83
    %v186 = vunpack.c.h.b16 %v83
    %v187 = vunpack.c.l.b16 %v84
    %v188 = vunpack.c.h.b16 %v84
    %v189 = vunpack.c.l.b16 %v85
    %v190 = vunpack.c.h.b16 %v85
    %v191 = vunpack.c.l.b16 %v86
    %v192 = vunpack.c.h.b16 %v86
    %v193 = vunpack.c.l.b16 %v87
    %v194 = vunpack.c.h.b16 %v87
    %v195 = vunpack.c.l.b16 %v88
    %v196 = vunpack.c.h.b16 %v88
    %v197 = vunpack.c.l.b16 %v89
    %v198 = vunpack.c.h.b16 %v89
    %v199 = vunpack.c.l.b16 %v90
    %v200 = vunpack.c.h.b16 %v90
    %v201 = vunpack.c.l.b16 %v91
    %v202 = vunpack.c.h.b16 %v91
    %v203 = vunpack.c.l.b16 %v92
    %v204 = vunpack.c.h.b16 %v92
    %v205 = vunpack.c.l.b16 %v93
    %v206 = vunpack.c.h.b16 %v93
    %v207 = vunpack.c.l.b16 %v94
    %v208 = vunpack.c.h.b16 %v94
    %v209 = vunpack.c.l.b16 %v95
    %v210 = vunpack.c.h.b16 %v95
    %v211 = vunpack.c.l.b16 %v96
    %v212 = vunpack.c.h.b16 %v96
    %v213 = vunpack.c.l.b16 %v97
    %v214 = vunpack.c.h.b16 %v97
    %v215 = vunpack.c.l.b16 %v98
    %v216 = vunpack.c.h.b16 %v98
    %v217 = vunpack.c.l.b16 %v99
    %v218 = vunpack.c.h.b16 %v99
    %v219 = vunpack.c.l.b16 %v100
    %v220 = vunpack.c.h.b16 %v100
    %v221 = vunpack.c.l.b16 %v101
    %v222 = vunpack.c.h.b16 %v101
    %v223 = vunpack.c.l.b16 %v102
    %v224 = vunpack.c.h.b16 %v102
    %v225 = vunpack.c.l.b16 %v103
    %v226 = vunpack.c.h.b16 %v103
    %v227 = vpack.c.b16 %v165, %v163
    %v228 = vpack.c.b16 %v166, %v164
    %v229 = vpack.c.b16 %v169, %v167
    %v230 = vpack.c.b16 %v170, %v168
    %v231 = vpack.c.b16 %v173, %v171
    %v232 = vpack.c.b16 %v174, %v172
    %v233 = vpack.c.b16 %v177, %v175
    %v234 = vpack.c.b16 %v178, %v176
    %v235 = vpack.c.b16 %v181, %v179
    %v236 = vpack.c.b16 %v182, %v180
    %v237 = vpack.c.b16 %v185, %v183
    %v238 = vpack.c.b16 %v186, %v184
    %v239 = vpack.c.b16 %v189, %v187
    %v240 = vpack.c.b16 %v190, %v188
    %v241 = vpack.c.b16 %v193, %v191
    %v242 = vpack.c.b16 %v194, %v192
    %v243 = vpack.c.b16 %v197, %v195
    %v244 = vpack.c.b16 %v198, %v196
    %v245 = vpack.c.b16 %v201, %v199
    %v246 = vpack.c.b16 %v202, %v200
    %v247 = vpack.c.b16 %v205, %v203
    %v248 = vpack.c.b16 %v206, %v204
    %v249 = vpack.c.b16 %v209, %v207
    %v250 = vpack.c.b16 %v210, %v208
    %v251 = vpack.c.b16 %v213, %v211
    %v252 = vpack.c.b16 %v214, %v212
    %v253 = vpack.c.b16 %v217, %v215
    %v254 = vpack.c.b16 %v218, %v216
    %v255 = vpack.c.b16 %v221, %v219
    %v256 = vpack.c.b16 %v222, %v220
    %v257 = vpack.c.b16 %v225, %v223
    %v258 = vpack.c.b16 %v226, %v224
    %291 = vmatprep.subr.bf16.mxu0 %v228
    %292 = vmatpush1.bf16.msra.mxu0 %v227
    %293 = vmatprep.subr.bf16.mxu0 %v230
    %294 = vmatpush1.bf16.msra.mxu0 %v229
    %295 = vmatprep.subr.bf16.mxu0 %v232
    %296 = vmatpush1.bf16.msra.mxu0 %v231
    %297 = vmatprep.subr.bf16.mxu0 %v234
    %298 = vmatpush1.bf16.msra.mxu0 %v233
    %299 = vmatprep.subr.bf16.mxu0 %v236
    %300 = vmatpush1.bf16.msra.mxu0 %v235
    %301 = vmatprep.subr.bf16.mxu0 %v238
    %302 = vmatpush1.bf16.msra.mxu0 %v237
    %303 = vmatprep.subr.bf16.mxu0 %v240
    %304 = vmatpush1.bf16.msra.mxu0 %v239
    %305 = vmatprep.subr.bf16.mxu0 %v242
    %306 = vmatpush1.bf16.msra.mxu0 %v241
    %307 = vmatprep.subr.bf16.mxu0 %v244
    %308 = vmatpush1.bf16.msra.mxu0 %v243
    %309 = vmatprep.subr.bf16.mxu0 %v246
    %310 = vmatpush1.bf16.msra.mxu0 %v245
    %311 = vmatprep.subr.bf16.mxu0 %v248
    %312 = vmatpush1.bf16.msra.mxu0 %v247
    %313 = vmatprep.subr.bf16.mxu0 %v250
    %314 = vmatpush1.bf16.msra.mxu0 %v249
    %315 = vmatprep.subr.bf16.mxu0 %v252
    %316 = vmatpush1.bf16.msra.mxu0 %v251
    %317 = vmatprep.subr.bf16.mxu0 %v254
    %318 = vmatpush1.bf16.msra.mxu0 %v253
    %319 = vmatprep.subr.bf16.mxu0 %v256
    %320 = vmatpush1.bf16.msra.mxu0 %v255
    %321 = vmatprep.subr.bf16.mxu0 %v258
    %322 = vmatpush1.bf16.msra.mxu0 %v257
    %323 = vmatprep.mubr.bf16.mxu0 %v130
    %324 = vmatmul.mubr.bf16.gmra.mrb[0].mxu0 %v129
    %v325 = vpop.f32.mrb[0].mxu0
    %v326 = vadd.f32 0.0, %v325
    %v327 = vpop.f32.mrb[0].mxu0
    %v328 = vadd.f32 0.0, %v327
    %v329 = vpop.f32.mrb[0].mxu0
    %v330 = vadd.f32 0.0, %v329
    %v331 = vpop.f32.mrb[0].mxu0
    %v332 = vadd.f32 0.0, %v331
    %333 = vdwg.mxu0
    %334 = vmatprep.subr.bf16.mxu0 %v228
    %335 = vmatpush1.bf16.msra.mxu0 %v227
    %336 = vmatprep.subr.bf16.mxu0 %v230
    %337 = vmatpush1.bf16.msra.mxu0 %v229
    %338 = vmatprep.subr.bf16.mxu0 %v232
    %339 = vmatpush1.bf16.msra.mxu0 %v231
    %340 = vmatprep.subr.bf16.mxu0 %v234
    %341 = vmatpush1.bf16.msra.mxu0 %v233
    %342 = vmatprep.subr.bf16.mxu0 %v236
    %343 = vmatpush1.bf16.msra.mxu0 %v235
    %344 = vmatprep.subr.bf16.mxu0 %v238
    %345 = vmatpush1.bf16.msra.mxu0 %v237
    %346 = vmatprep.subr.bf16.mxu0 %v240
    %347 = vmatpush1.bf16.msra.mxu0 %v239
    %348 = vmatprep.subr.bf16.mxu0 %v242
    %349 = vmatpush1.bf16.msra.mxu0 %v241
    %350 = vmatprep.subr.bf16.mxu0 %v244
    %351 = vmatpush1.bf16.msra.mxu0 %v243
    %352 = vmatprep.subr.bf16.mxu0 %v246
    %353 = vmatpush1.bf16.msra.mxu0 %v245
    %354 = vmatprep.subr.bf16.mxu0 %v248
    %355 = vmatpush1.bf16.msra.mxu0 %v247
    %356 = vmatprep.subr.bf16.mxu0 %v250
    %357 = vmatpush1.bf16.msra.mxu0 %v249
    %358 = vmatprep.subr.bf16.mxu0 %v252
    %359 = vmatpush1.bf16.msra.mxu0 %v251
    %360 = vmatprep.subr.bf16.mxu0 %v254
    %361 = vmatpush1.bf16.msra.mxu0 %v253
    %362 = vmatprep.subr.bf16.mxu0 %v256
    %363 = vmatpush1.bf16.msra.mxu0 %v255
    %364 = vmatprep.subr.bf16.mxu0 %v258
    %365 = vmatpush1.bf16.msra.mxu0 %v257
    %366 = vmatprep.mubr.bf16.mxu0 %v120
    %367 = vmatmul.mubr.bf16.gmra.mrb[0].mxu0 %v119
    %v368 = vpop.f32.mrb[0].mxu0
    %v369 = vadd.f32 %v326, %v368
    %v370 = vpop.f32.mrb[0].mxu0
    %v371 = vadd.f32 %v328, %v370
    %v372 = vpop.f32.mrb[0].mxu0
    %v373 = vadd.f32 %v330, %v372
    %v374 = vpop.f32.mrb[0].mxu0
    %v375 = vadd.f32 %v332, %v374
    %376 = vdwg.mxu0
    %v377 = vsub.f32 %v115, %v369
    %v378 = vsub.f32 %v116, %v371
    %v379 = vsub.f32 %v117, %v373
    %v380 = vsub.f32 %v118, %v375
    %v381 = vmul.f32 %v377, %v377
    %v382 = vmul.f32 %v378, %v378
    %v383 = vmul.f32 %v379, %v379
    %v384 = vmul.f32 %v380, %v380
    %v385 = vpack.c.bf16 %v383, %v381
    %v386 = vpack.c.bf16 %v384, %v382
    %v387 = vunpack.c.l.bf16 %v385
    %v388 = vunpack.c.l.bf16 %v386
    %v389 = vunpack.c.h.bf16 %v385
    %v390 = vunpack.c.h.bf16 %v386
    %v391 = vsub.f32 %v381, %v387
    %v392 = vsub.f32 %v382, %v388
    %v393 = vsub.f32 %v383, %v389
    %v394 = vsub.f32 %v384, %v390
    %v395 = vpack.c.bf16 %v393, %v391
    %v396 = vpack.c.bf16 %v394, %v392
    %397 = vmatprep.subr.bf16.mxu0 %v228
    %398 = vmatpush1.bf16.msra.mxu0 %v227
    %399 = vmatprep.subr.bf16.mxu0 %v230
    %400 = vmatpush1.bf16.msra.mxu0 %v229
    %401 = vmatprep.subr.bf16.mxu0 %v232
    %402 = vmatpush1.bf16.msra.mxu0 %v231
    %403 = vmatprep.subr.bf16.mxu0 %v234
    %404 = vmatpush1.bf16.msra.mxu0 %v233
    %405 = vmatprep.subr.bf16.mxu0 %v236
    %406 = vmatpush1.bf16.msra.mxu0 %v235
    %407 = vmatprep.subr.bf16.mxu0 %v238
    %408 = vmatpush1.bf16.msra.mxu0 %v237
    %409 = vmatprep.subr.bf16.mxu0 %v240
    %410 = vmatpush1.bf16.msra.mxu0 %v239
    %411 = vmatprep.subr.bf16.mxu0 %v242
    %412 = vmatpush1.bf16.msra.mxu0 %v241
    %413 = vmatprep.subr.bf16.mxu0 %v244
    %414 = vmatpush1.bf16.msra.mxu0 %v243
    %415 = vmatprep.subr.bf16.mxu0 %v246
    %416 = vmatpush1.bf16.msra.mxu0 %v245
    %417 = vmatprep.subr.bf16.mxu0 %v248
    %418 = vmatpush1.bf16.msra.mxu0 %v247
    %419 = vmatprep.subr.bf16.mxu0 %v250
    %420 = vmatpush1.bf16.msra.mxu0 %v249
    %421 = vmatprep.subr.bf16.mxu0 %v252
    %422 = vmatpush1.bf16.msra.mxu0 %v251
    %423 = vmatprep.subr.bf16.mxu0 %v254
    %424 = vmatpush1.bf16.msra.mxu0 %v253
    %425 = vmatprep.subr.bf16.mxu0 %v256
    %426 = vmatpush1.bf16.msra.mxu0 %v255
    %427 = vmatprep.subr.bf16.mxu0 %v258
    %428 = vmatpush1.bf16.msra.mxu0 %v257
    %429 = vmatprep.mubr.bf16.mxu0 %v396
    %430 = vmatmul.mubr.bf16.gmra.mrb[0].mxu0 %v395
    %v431 = vpop.f32.mrb[0].mxu0
    %v432 = vadd.f32 0.0, %v431
    %v433 = vpop.f32.mrb[0].mxu0
    %v434 = vadd.f32 0.0, %v433
    %v435 = vpop.f32.mrb[0].mxu0
    %v436 = vadd.f32 0.0, %v435
    %v437 = vpop.f32.mrb[0].mxu0
    %v438 = vadd.f32 0.0, %v437
    %439 = vdwg.mxu0
    %440 = vmatprep.subr.bf16.mxu0 %v228
    %441 = vmatpush1.bf16.msra.mxu0 %v227
    %442 = vmatprep.subr.bf16.mxu0 %v230
    %443 = vmatpush1.bf16.msra.mxu0 %v229
    %444 = vmatprep.subr.bf16.mxu0 %v232
    %445 = vmatpush1.bf16.msra.mxu0 %v231
    %446 = vmatprep.subr.bf16.mxu0 %v234
    %447 = vmatpush1.bf16.msra.mxu0 %v233
    %448 = vmatprep.subr.bf16.mxu0 %v236
    %449 = vmatpush1.bf16.msra.mxu0 %v235
    %450 = vmatprep.subr.bf16.mxu0 %v238
    %451 = vmatpush1.bf16.msra.mxu0 %v237
    %452 = vmatprep.subr.bf16.mxu0 %v240
    %453 = vmatpush1.bf16.msra.mxu0 %v239
    %454 = vmatprep.subr.bf16.mxu0 %v242
    %455 = vmatpush1.bf16.msra.mxu0 %v241
    %456 = vmatprep.subr.bf16.mxu0 %v244
    %457 = vmatpush1.bf16.msra.mxu0 %v243
    %458 = vmatprep.subr.bf16.mxu0 %v246
    %459 = vmatpush1.bf16.msra.mxu0 %v245
    %460 = vmatprep.subr.bf16.mxu0 %v248
    %461 = vmatpush1.bf16.msra.mxu0 %v247
    %462 = vmatprep.subr.bf16.mxu0 %v250
    %463 = vmatpush1.bf16.msra.mxu0 %v249
    %464 = vmatprep.subr.bf16.mxu0 %v252
    %465 = vmatpush1.bf16.msra.mxu0 %v251
    %466 = vmatprep.subr.bf16.mxu0 %v254
    %467 = vmatpush1.bf16.msra.mxu0 %v253
    %468 = vmatprep.subr.bf16.mxu0 %v256
    %469 = vmatpush1.bf16.msra.mxu0 %v255
    %470 = vmatprep.subr.bf16.mxu0 %v258
    %471 = vmatpush1.bf16.msra.mxu0 %v257
    %472 = vmatprep.mubr.bf16.mxu0 %v386
    %473 = vmatmul.mubr.bf16.gmra.mrb[0].mxu0 %v385
    %v474 = vpop.f32.mrb[0].mxu0
    %v475 = vadd.f32 %v432, %v474
    %v476 = vpop.f32.mrb[0].mxu0
    %v477 = vadd.f32 %v434, %v476
    %v478 = vpop.f32.mrb[0].mxu0
    %v479 = vadd.f32 %v436, %v478
    %v480 = vpop.f32.mrb[0].mxu0
    %v481 = vadd.f32 %v438, %v480
    %482 = vdwg.mxu0
    %v483 = vadd.f32 %v475, 1e-05
    %v484 = vadd.f32 %v477, 1e-05
    %v485 = vadd.f32 %v479, 1e-05
    %v486 = vadd.f32 %v481, 1e-05
    %v487 = vrsqrt.pop %v483
    %v488 = vrsqrt.pop %v484
    %v489 = vrsqrt.pop %v485
    %v490 = vrsqrt.pop %v486
    %v491 = vmul.f32 %v377, %v487
    %v492 = vmul.f32 %v378, %v488
    %v493 = vmul.f32 %v379, %v489
    %v494 = vmul.f32 %v380, %v490
    %v496 = vlaneseq
    %v497 = vshrl.u32 %v496, 7
    %v498 = vsub.s32 0, %v497
    %v499 = vrot.slane %v104, %v498
    %v500 = vlaneseq
    %v501 = vshrl.u32 %v500, 7
    %v502 = vsub.s32 1, %v501
    %v503 = vrot.slane %v104, %v502
    %v506 = vmul.f32 %v491, %v499
    %v507 = vmul.f32 %v492, %v503
    %v508 = vmul.f32 %v493, %v499
    %v509 = vmul.f32 %v494, %v503
    %v511 = vlaneseq
    %v512 = vshrl.u32 %v511, 7
    %v513 = vsub.s32 0, %v512
    %v514 = vrot.slane %v105, %v513
    %v515 = vlaneseq
    %v516 = vshrl.u32 %v515, 7
    %v517 = vsub.s32 1, %v516
    %v518 = vrot.slane %v105, %v517
    %v521 = vadd.f32 %v506, %v514
    %v522 = vadd.f32 %v507, %v518
    %v523 = vadd.f32 %v508, %v514
    %v524 = vadd.f32 %v509, %v518
    %v525 = vadd.f32 %v521, %v523
    %v526 = vrot.slane %v525, 4
    %v527 = vadd.f32 %v525, %v526
    %v528 = vrot.slane %v527, 2
    %v529 = vadd.f32 %v527, %v528
    %v530 = vrot.slane %v529, 1
    %v531 = vadd.f32 %v529, %v530
    %v532 = vadd.f32 %v522, %v524
    %v533 = vrot.slane %v532, 4
    %v534 = vadd.f32 %v532, %v533
    %v535 = vrot.slane %v534, 2
    %v536 = vadd.f32 %v534, %v535
    %v537 = vrot.slane %v536, 1
    %v538 = vadd.f32 %v536, %v537
    %v541 = vcombine.low %v531, %v538
    %v543 = vunpack.c.l.s4 1966171168
    %v544 = vunpack.c.0.s8 %v543
    %v545 = vlaneseq
    %v546 = vshrl.u32 %v545, 7
    %v547 = vsub.s32 %v544, %v546
    %v548 = vrot.slane %v541, %v547
    %v550 = vunpack.c.l.s4 1966171168
    %v551 = vunpack.c.0.s8 %v550
    %v552 = vlaneseq
    %v553 = vshrl.u32 %v552, 7
    %v554 = vsub.s32 %v551, %v553
    %v555 = vrot.slane %v548, %v554
    %v557 = vmul.f32 %v111, %v555
    %v559 = vlaneseq
    %v560 = vshrl.u32 %v559, 7
    %v561 = vsub.s32 0, %v560
    %v562 = vrot.slane %v557, %v561
    %v563 = vlaneseq
    %v564 = vshrl.u32 %v563, 7
    %v565 = vsub.s32 1, %v564
    %v566 = vrot.slane %v557, %v565
    %vm569 = vcmask 1040384
    %v570 = vsel %vm569, %v562, 0.0
    %v571 = vsel %vm569, %v566, 0.0
    %v572 = vadd.f32 %v570, %v571
    %573 = vadd.xlane.f32.xlu0 %v572
    %v574 = vpop.xlane.xlu0 %573
    %v575 = vadd.f32 %v574, %v112
    %v576 = vmax.f32 %v575, 0.0
    %578 = vset.pattern.permute.xlu0 0
    %579 = vperm.xlu0 %578, %v576
    %v580 = vpop.permute.xlu0 %579
    %v581 = vlaneseq
    %v582 = vshrl.u32 %v581, 7
    %v583 = vsub.s32 0, %v582
    %v584 = vrot.slane %v580, %v583
    %v586 = vmul.f32 %v113, %v584
    %v587 = vadd.f32 %v586, 0.0
    %v588 = vadd.f32 %v587, %v114
    %v589 = vtanh.pop %v588
    %v591 = vlaneseq
    %v592 = vshrl.u32 %v591, 7
    %v593 = vsub.s32 0, %v592
    %v594 = vrot.slane %v589, %v593
    %v595 = vlaneseq
    %v596 = vshrl.u32 %v595, 7
    %v597 = vsub.s32 1, %v596
    %v598 = vrot.slane %v589, %v597
    %v601 = vmul.f32 %v521, %v594
    %v602 = vmul.f32 %v522, %v598
    %v603 = vmul.f32 %v523, %v594
    %v604 = vmul.f32 %v524, %v598
    %vm605 = vcmp.ge.s32.totalorder %v67, 16
    %vm606 = vcmp.ge.s32.totalorder %v68, 16
    %607 = vrot.lane.b32.xlu0 %v521, 16
    %v608 = vpop.permute.xlu0 %607
    %609 = vrot.lane.b32.xlu0 %v523, 16
    %v610 = vpop.permute.xlu0 %609
    %611 = vrot.lane.b32.xlu0 %v522, 16
    %v612 = vpop.permute.xlu0 %611
    %613 = vrot.lane.b32.xlu0 %v524, 16
    %v614 = vpop.permute.xlu0 %613
    %vm615 = vcmp.lt.s32.totalorder %v67, 16
    %v616 = vsel %vm615, %v608, %v612
    %v617 = vsel %vm615, %v610, %v614
    %v618 = vsel %vm615, %v612, %v608
    %v619 = vsel %vm615, %v614, %v610
    %v620 = vsel %vm605, 1, 0
    %v621 = vsel %vm606, 1, 0
    %vm622 = vcmp.eq.s32.totalorder %v620, 1
    %vm623 = vcmp.eq.s32.totalorder %v621, 1
    %v624 = vsel %vm622, %v618, 0.0
    %v625 = vsel %vm623, %v616, 0.0
    %v626 = vsel %vm622, %v619, 0.0
    %v627 = vsel %vm623, %v617, 0.0
    %vm628 = vcmp.lt.s32.totalorder %v67, 240
    %vm629 = vcmp.lt.s32.totalorder %v68, 240
    %630 = vrot.lane.b32.xlu0 %v521, 112
    %v631 = vpop.permute.xlu0 %630
    %632 = vrot.lane.b32.xlu0 %v523, 112
    %v633 = vpop.permute.xlu0 %632
    %634 = vrot.lane.b32.xlu0 %v522, 112
    %v635 = vpop.permute.xlu0 %634
    %636 = vrot.lane.b32.xlu0 %v524, 112
    %v637 = vpop.permute.xlu0 %636
    %vm638 = vcmp.lt.s32.totalorder %v67, 112
    %v639 = vsel %vm638, %v631, %v635
    %v640 = vsel %vm638, %v633, %v637
    %v641 = vsel %vm638, %v635, %v631
    %v642 = vsel %vm638, %v637, %v633
    %v643 = vsel %vm628, 1, 0
    %v644 = vsel %vm629, 1, 0
    %vm645 = vcmp.eq.s32.totalorder %v643, 1
    %vm646 = vcmp.eq.s32.totalorder %v644, 1
    %v647 = vsel %vm645, %v639, 0.0
    %v648 = vsel %vm646, %v641, 0.0
    %v649 = vsel %vm645, %v640, 0.0
    %v650 = vsel %vm646, %v642, 0.0
    %v651 = vlaneseq
    %v652 = vshrl.u32 %v651, 7
    %v653 = vsub.s32 0, %v652
    %v654 = vrot.slane %v106, %v653
    %v655 = vlaneseq
    %v656 = vshrl.u32 %v655, 7
    %v657 = vsub.s32 0, %v656
    %v658 = vrot.slane %v107, %v657
    %v659 = vmul.f32 %v624, %v654
    %v660 = vmul.f32 %v625, %v658
    %v661 = vmul.f32 %v626, %v654
    %v662 = vmul.f32 %v627, %v658
    %v663 = vlaneseq
    %v664 = vshrl.u32 %v663, 7
    %v665 = vsub.s32 1, %v664
    %v666 = vrot.slane %v106, %v665
    %v667 = vlaneseq
    %v668 = vshrl.u32 %v667, 7
    %v669 = vsub.s32 1, %v668
    %v670 = vrot.slane %v107, %v669
    %v671 = vmul.f32 %v521, %v666
    %v672 = vmul.f32 %v522, %v670
    %v673 = vmul.f32 %v523, %v666
    %v674 = vmul.f32 %v524, %v670
    %v675 = vadd.f32 %v659, %v671
    %v676 = vadd.f32 %v660, %v672
    %v677 = vadd.f32 %v661, %v673
    %v678 = vadd.f32 %v662, %v674
    %v679 = vlaneseq
    %v680 = vshrl.u32 %v679, 7
    %v681 = vsub.s32 2, %v680
    %v682 = vrot.slane %v106, %v681
    %v683 = vlaneseq
    %v684 = vshrl.u32 %v683, 7
    %v685 = vsub.s32 2, %v684
    %v686 = vrot.slane %v107, %v685
    %v687 = vmul.f32 %v647, %v682
    %v688 = vmul.f32 %v648, %v686
    %v689 = vmul.f32 %v649, %v682
    %v690 = vmul.f32 %v650, %v686
    %v691 = vadd.f32 %v675, %v687
    %v692 = vadd.f32 %v676, %v688
    %v693 = vadd.f32 %v677, %v689
    %v694 = vadd.f32 %v678, %v690
    %v695 = vlaneseq
    %v696 = vshrl.u32 %v695, 7
    %v697 = vsub.s32 3, %v696
    %v698 = vrot.slane %v106, %v697
    %v699 = vlaneseq
    %v700 = vshrl.u32 %v699, 7
    %v701 = vsub.s32 3, %v700
    %v702 = vrot.slane %v107, %v701
    %v703 = vmul.f32 %v624, %v698
    %v704 = vmul.f32 %v625, %v702
    %v705 = vmul.f32 %v626, %v698
    %v706 = vmul.f32 %v627, %v702
    %v707 = vlaneseq
    %v708 = vshrl.u32 %v707, 7
    %v709 = vsub.s32 4, %v708
    %v710 = vrot.slane %v106, %v709
    %v711 = vlaneseq
    %v712 = vshrl.u32 %v711, 7
    %v713 = vsub.s32 4, %v712
    %v714 = vrot.slane %v107, %v713
    %v715 = vmul.f32 %v521, %v710
    %v716 = vmul.f32 %v522, %v714
    %v717 = vmul.f32 %v523, %v710
    %v718 = vmul.f32 %v524, %v714
    %v719 = vadd.f32 %v703, %v715
    %v720 = vadd.f32 %v704, %v716
    %v721 = vadd.f32 %v705, %v717
    %v722 = vadd.f32 %v706, %v718
    %v723 = vlaneseq
    %v724 = vshrl.u32 %v723, 7
    %v725 = vsub.s32 5, %v724
    %v726 = vrot.slane %v106, %v725
    %v727 = vlaneseq
    %v728 = vshrl.u32 %v727, 7
    %v729 = vsub.s32 5, %v728
    %v730 = vrot.slane %v107, %v729
    %v731 = vmul.f32 %v647, %v726
    %v732 = vmul.f32 %v648, %v730
    %v733 = vmul.f32 %v649, %v726
    %v734 = vmul.f32 %v650, %v730
    %v735 = vadd.f32 %v719, %v731
    %v736 = vadd.f32 %v720, %v732
    %v737 = vadd.f32 %v721, %v733
    %v738 = vadd.f32 %v722, %v734
    %v739 = vlaneseq
    %v740 = vshrl.u32 %v739, 7
    %v741 = vsub.s32 6, %v740
    %v742 = vrot.slane %v106, %v741
    %v743 = vlaneseq
    %v744 = vshrl.u32 %v743, 7
    %v745 = vsub.s32 6, %v744
    %v746 = vrot.slane %v107, %v745
    %v747 = vmul.f32 %v624, %v742
    %v748 = vmul.f32 %v625, %v746
    %v749 = vmul.f32 %v626, %v742
    %v750 = vmul.f32 %v627, %v746
    %v751 = vlaneseq
    %v752 = vshrl.u32 %v751, 7
    %v753 = vsub.s32 7, %v752
    %v754 = vrot.slane %v106, %v753
    %v755 = vlaneseq
    %v756 = vshrl.u32 %v755, 7
    %v757 = vsub.s32 7, %v756
    %v758 = vrot.slane %v107, %v757
    %v759 = vmul.f32 %v521, %v754
    %v760 = vmul.f32 %v522, %v758
    %v761 = vmul.f32 %v523, %v754
    %v762 = vmul.f32 %v524, %v758
    %v763 = vadd.f32 %v747, %v759
    %v764 = vadd.f32 %v748, %v760
    %v765 = vadd.f32 %v749, %v761
    %v766 = vadd.f32 %v750, %v762
    %v767 = vlaneseq
    %v768 = vshrl.u32 %v767, 7
    %v769 = vsub.s32 0, %v768
    %v770 = vrot.slane %v108, %v769
    %v771 = vlaneseq
    %v772 = vshrl.u32 %v771, 7
    %v773 = vsub.s32 0, %v772
    %v774 = vrot.slane %v109, %v773
    %v775 = vmul.f32 %v647, %v770
    %v776 = vmul.f32 %v648, %v774
    %v777 = vmul.f32 %v649, %v770
    %v778 = vmul.f32 %v650, %v774
    %v779 = vadd.f32 %v763, %v775
    %v780 = vadd.f32 %v764, %v776
    %v781 = vadd.f32 %v765, %v777
    %v782 = vadd.f32 %v766, %v778
    %vm783 = vcmp.ge.s32.totalorder %v70, 1
    %vm784 = vcmp.ge.s32.totalorder %v71, 1
    %v785 = vrot.slane %v691, 7
    %v786 = vrot.slane %v692, 7
    %v787 = vrot.slane %v693, 7
    %v788 = vrot.slane %v694, 7
    %vm789 = vcmp.lt.s32.totalorder %v70, 1
    %v790 = vsel %vm789, %v785, %v787
    %v791 = vsel %vm789, %v786, %v788
    %v792 = vsel %vm789, %v787, %v785
    %v793 = vsel %vm789, %v788, %v786
    %v794 = vsel %vm783, 1, 0
    %v795 = vsel %vm784, 1, 0
    %vm796 = vcmp.eq.s32.totalorder %v794, 1
    %vm797 = vcmp.eq.s32.totalorder %v795, 1
    %v798 = vsel %vm796, %v792, 0.0
    %v799 = vsel %vm796, %v793, 0.0
    %v800 = vsel %vm797, %v790, 0.0
    %v801 = vsel %vm797, %v791, 0.0
    %v802 = vadd.f32 %v735, %v798
    %v803 = vadd.f32 %v736, %v799
    %v804 = vadd.f32 %v737, %v800
    %v805 = vadd.f32 %v738, %v801
    %vm806 = vcmp.le.s32.totalorder %v70, 14
    %vm807 = vcmp.le.s32.totalorder %v71, 14
    %v808 = vrot.slane %v779, 1
    %v809 = vrot.slane %v780, 1
    %v810 = vrot.slane %v781, 1
    %v811 = vrot.slane %v782, 1
    %vm812 = vcmp.lt.s32.totalorder %v70, 7
    %v813 = vsel %vm812, %v808, %v810
    %v814 = vsel %vm812, %v809, %v811
    %v815 = vsel %vm812, %v810, %v808
    %v816 = vsel %vm812, %v811, %v809
    %v817 = vsel %vm806, 1, 0
    %v818 = vsel %vm807, 1, 0
    %vm819 = vcmp.eq.s32.totalorder %v817, 1
    %vm820 = vcmp.eq.s32.totalorder %v818, 1
    %v821 = vsel %vm819, %v813, 0.0
    %v822 = vsel %vm819, %v814, 0.0
    %v823 = vsel %vm820, %v815, 0.0
    %v824 = vsel %vm820, %v816, 0.0
    %v825 = vadd.f32 %v802, %v821
    %v826 = vadd.f32 %v803, %v822
    %v827 = vadd.f32 %v804, %v823
    %v828 = vadd.f32 %v805, %v824
    %v830 = vlaneseq
    %v831 = vshrl.u32 %v830, 7
    %v832 = vsub.s32 0, %v831
    %v833 = vrot.slane %v110, %v832
    %v834 = vlaneseq
    %v835 = vshrl.u32 %v834, 7
    %v836 = vsub.s32 1, %v835
    %v837 = vrot.slane %v110, %v836
    %v840 = vadd.f32 %v825, %v833
    %v841 = vadd.f32 %v826, %v837
    %v842 = vadd.f32 %v827, %v833
    %v843 = vadd.f32 %v828, %v837
    %v844 = vmul.f32 %v840, %v601
    %v845 = vmul.f32 %v841, %v602
    %v846 = vmul.f32 %v842, %v603
    %v847 = vmul.f32 %v843, %v604
    %v848 = vadd.f32 %v844, %v115
    %v849 = vadd.f32 %v845, %v116
    %v850 = vadd.f32 %v846, %v117
    %v851 = vadd.f32 %v847, %v118
    %852 = vst [vmem:[#allocation8] sm:$0xff] %v848
    %853 = vst [vmem:[#allocation8 + $0x8] sm:$0xff] %v849
    %854 = vst [vmem:[#allocation8 + $0x10] sm:$0xff] %v850
    %855 = vst [vmem:[#allocation8 + $0x18] sm:$0xff] %v851
    %s856 = scalar_lea.vmem [#allocation3], 32
    %v857 = vld [vmem:[%s856] sm:$0xff]
    %v858 = vld [vmem:[%s856 + $0x8] sm:$0xff]
    %v859 = vld [vmem:[%s856 + $0x10] sm:$0xff]
    %v860 = vld [vmem:[%s856 + $0x18] sm:$0xff]
    %v861 = vpack.c.bf16 %v859, %v857
    %v862 = vpack.c.bf16 %v860, %v858
    %v863 = vunpack.c.l.bf16 %v861
    %v864 = vunpack.c.l.bf16 %v862
    %v865 = vunpack.c.h.bf16 %v861
    %v866 = vunpack.c.h.bf16 %v862
    %v867 = vsub.f32 %v857, %v863
    %v868 = vsub.f32 %v858, %v864
    %v869 = vsub.f32 %v859, %v865
    %v870 = vsub.f32 %v860, %v866
    %v871 = vpack.c.bf16 %v869, %v867
    %v872 = vpack.c.bf16 %v870, %v868
    %873 = vmatprep.subr.bf16.mxu0 %v228
    %874 = vmatpush1.bf16.msra.mxu0 %v227
    %875 = vmatprep.subr.bf16.mxu0 %v230
    %876 = vmatpush1.bf16.msra.mxu0 %v229
    %877 = vmatprep.subr.bf16.mxu0 %v232
    %878 = vmatpush1.bf16.msra.mxu0 %v231
    %879 = vmatprep.subr.bf16.mxu0 %v234
    %880 = vmatpush1.bf16.msra.mxu0 %v233
    %881 = vmatprep.subr.bf16.mxu0 %v236
    %882 = vmatpush1.bf16.msra.mxu0 %v235
    %883 = vmatprep.subr.bf16.mxu0 %v238
    %884 = vmatpush1.bf16.msra.mxu0 %v237
    %885 = vmatprep.subr.bf16.mxu0 %v240
    %886 = vmatpush1.bf16.msra.mxu0 %v239
    %887 = vmatprep.subr.bf16.mxu0 %v242
    %888 = vmatpush1.bf16.msra.mxu0 %v241
    %889 = vmatprep.subr.bf16.mxu0 %v244
    %890 = vmatpush1.bf16.msra.mxu0 %v243
    %891 = vmatprep.subr.bf16.mxu0 %v246
    %892 = vmatpush1.bf16.msra.mxu0 %v245
    %893 = vmatprep.subr.bf16.mxu0 %v248
    %894 = vmatpush1.bf16.msra.mxu0 %v247
    %895 = vmatprep.subr.bf16.mxu0 %v250
    %896 = vmatpush1.bf16.msra.mxu0 %v249
    %897 = vmatprep.subr.bf16.mxu0 %v252
    %898 = vmatpush1.bf16.msra.mxu0 %v251
    %899 = vmatprep.subr.bf16.mxu0 %v254
    %900 = vmatpush1.bf16.msra.mxu0 %v253
    %901 = vmatprep.subr.bf16.mxu0 %v256
    %902 = vmatpush1.bf16.msra.mxu0 %v255
    %903 = vmatprep.subr.bf16.mxu0 %v258
    %904 = vmatpush1.bf16.msra.mxu0 %v257
    %905 = vmatprep.mubr.bf16.mxu0 %v872
    %906 = vmatmul.mubr.bf16.gmra.mrb[0].mxu0 %v871
    %v907 = vpop.f32.mrb[0].mxu0
    %v908 = vadd.f32 0.0, %v907
    %v909 = vpop.f32.mrb[0].mxu0
    %v910 = vadd.f32 0.0, %v909
    %v911 = vpop.f32.mrb[0].mxu0
    %v912 = vadd.f32 0.0, %v911
    %v913 = vpop.f32.mrb[0].mxu0
    %v914 = vadd.f32 0.0, %v913
    %915 = vdwg.mxu0
    %916 = vmatprep.subr.bf16.mxu0 %v228
    %917 = vmatpush1.bf16.msra.mxu0 %v227
    %918 = vmatprep.subr.bf16.mxu0 %v230
    %919 = vmatpush1.bf16.msra.mxu0 %v229
    %920 = vmatprep.subr.bf16.mxu0 %v232
    %921 = vmatpush1.bf16.msra.mxu0 %v231
    %922 = vmatprep.subr.bf16.mxu0 %v234
    %923 = vmatpush1.bf16.msra.mxu0 %v233
    %924 = vmatprep.subr.bf16.mxu0 %v236
    %925 = vmatpush1.bf16.msra.mxu0 %v235
    %926 = vmatprep.subr.bf16.mxu0 %v238
    %927 = vmatpush1.bf16.msra.mxu0 %v237
    %928 = vmatprep.subr.bf16.mxu0 %v240
    %929 = vmatpush1.bf16.msra.mxu0 %v239
    %930 = vmatprep.subr.bf16.mxu0 %v242
    %931 = vmatpush1.bf16.msra.mxu0 %v241
    %932 = vmatprep.subr.bf16.mxu0 %v244
    %933 = vmatpush1.bf16.msra.mxu0 %v243
    %934 = vmatprep.subr.bf16.mxu0 %v246
    %935 = vmatpush1.bf16.msra.mxu0 %v245
    %936 = vmatprep.subr.bf16.mxu0 %v248
    %937 = vmatpush1.bf16.msra.mxu0 %v247
    %938 = vmatprep.subr.bf16.mxu0 %v250
    %939 = vmatpush1.bf16.msra.mxu0 %v249
    %940 = vmatprep.subr.bf16.mxu0 %v252
    %941 = vmatpush1.bf16.msra.mxu0 %v251
    %942 = vmatprep.subr.bf16.mxu0 %v254
    %943 = vmatpush1.bf16.msra.mxu0 %v253
    %944 = vmatprep.subr.bf16.mxu0 %v256
    %945 = vmatpush1.bf16.msra.mxu0 %v255
    %946 = vmatprep.subr.bf16.mxu0 %v258
    %947 = vmatpush1.bf16.msra.mxu0 %v257
    %948 = vmatprep.mubr.bf16.mxu0 %v862
    %949 = vmatmul.mubr.bf16.gmra.mrb[0].mxu0 %v861
    %v950 = vpop.f32.mrb[0].mxu0
    %v951 = vadd.f32 %v908, %v950
    %v952 = vpop.f32.mrb[0].mxu0
    %v953 = vadd.f32 %v910, %v952
    %v954 = vpop.f32.mrb[0].mxu0
    %v955 = vadd.f32 %v912, %v954
    %v956 = vpop.f32.mrb[0].mxu0
    %v957 = vadd.f32 %v914, %v956
    %958 = vdwg.mxu0
    %v959 = vsub.f32 %v857, %v951
    %v960 = vsub.f32 %v858, %v953
    %v961 = vsub.f32 %v859, %v955
    %v962 = vsub.f32 %v860, %v957
    %v963 = vmul.f32 %v959, %v959
    %v964 = vmul.f32 %v960, %v960
    %v965 = vmul.f32 %v961, %v961
    %v966 = vmul.f32 %v962, %v962
    %v967 = vpack.c.bf16 %v965, %v963
    %v968 = vpack.c.bf16 %v966, %v964
    %v969 = vunpack.c.l.bf16 %v967
    %v970 = vunpack.c.l.bf16 %v968
    %v971 = vunpack.c.h.bf16 %v967
    %v972 = vunpack.c.h.bf16 %v968
    %v973 = vsub.f32 %v963, %v969
    %v974 = vsub.f32 %v964, %v970
    %v975 = vsub.f32 %v965, %v971
    %v976 = vsub.f32 %v966, %v972
    %v977 = vpack.c.bf16 %v975, %v973
    %v978 = vpack.c.bf16 %v976, %v974
    %979 = vmatprep.subr.bf16.mxu0 %v228
    %980 = vmatpush1.bf16.msra.mxu0 %v227
    %981 = vmatprep.subr.bf16.mxu0 %v230
    %982 = vmatpush1.bf16.msra.mxu0 %v229
    %983 = vmatprep.subr.bf16.mxu0 %v232
    %984 = vmatpush1.bf16.msra.mxu0 %v231
    %985 = vmatprep.subr.bf16.mxu0 %v234
    %986 = vmatpush1.bf16.msra.mxu0 %v233
    %987 = vmatprep.subr.bf16.mxu0 %v236
    %988 = vmatpush1.bf16.msra.mxu0 %v235
    %989 = vmatprep.subr.bf16.mxu0 %v238
    %990 = vmatpush1.bf16.msra.mxu0 %v237
    %991 = vmatprep.subr.bf16.mxu0 %v240
    %992 = vmatpush1.bf16.msra.mxu0 %v239
    %993 = vmatprep.subr.bf16.mxu0 %v242
    %994 = vmatpush1.bf16.msra.mxu0 %v241
    %995 = vmatprep.subr.bf16.mxu0 %v244
    %996 = vmatpush1.bf16.msra.mxu0 %v243
    %997 = vmatprep.subr.bf16.mxu0 %v246
    %998 = vmatpush1.bf16.msra.mxu0 %v245
    %999 = vmatprep.subr.bf16.mxu0 %v248
    %1000 = vmatpush1.bf16.msra.mxu0 %v247
    %1001 = vmatprep.subr.bf16.mxu0 %v250
    %1002 = vmatpush1.bf16.msra.mxu0 %v249
    %1003 = vmatprep.subr.bf16.mxu0 %v252
    %1004 = vmatpush1.bf16.msra.mxu0 %v251
    %1005 = vmatprep.subr.bf16.mxu0 %v254
    %1006 = vmatpush1.bf16.msra.mxu0 %v253
    %1007 = vmatprep.subr.bf16.mxu0 %v256
    %1008 = vmatpush1.bf16.msra.mxu0 %v255
    %1009 = vmatprep.subr.bf16.mxu0 %v258
    %1010 = vmatpush1.bf16.msra.mxu0 %v257
    %1011 = vmatprep.mubr.bf16.mxu0 %v978
    %1012 = vmatmul.mubr.bf16.gmra.mrb[0].mxu0 %v977
    %v1013 = vpop.f32.mrb[0].mxu0
    %v1014 = vadd.f32 0.0, %v1013
    %v1015 = vpop.f32.mrb[0].mxu0
    %v1016 = vadd.f32 0.0, %v1015
    %v1017 = vpop.f32.mrb[0].mxu0
    %v1018 = vadd.f32 0.0, %v1017
    %v1019 = vpop.f32.mrb[0].mxu0
    %v1020 = vadd.f32 0.0, %v1019
    %1021 = vdwg.mxu0
    %1022 = vmatprep.subr.bf16.mxu0 %v228
    %1023 = vmatpush1.bf16.msra.mxu0 %v227
    %1024 = vmatprep.subr.bf16.mxu0 %v230
    %1025 = vmatpush1.bf16.msra.mxu0 %v229
    %1026 = vmatprep.subr.bf16.mxu0 %v232
    %1027 = vmatpush1.bf16.msra.mxu0 %v231
    %1028 = vmatprep.subr.bf16.mxu0 %v234
    %1029 = vmatpush1.bf16.msra.mxu0 %v233
    %1030 = vmatprep.subr.bf16.mxu0 %v236
    %1031 = vmatpush1.bf16.msra.mxu0 %v235
    %1032 = vmatprep.subr.bf16.mxu0 %v238
    %1033 = vmatpush1.bf16.msra.mxu0 %v237
    %1034 = vmatprep.subr.bf16.mxu0 %v240
    %1035 = vmatpush1.bf16.msra.mxu0 %v239
    %1036 = vmatprep.subr.bf16.mxu0 %v242
    %1037 = vmatpush1.bf16.msra.mxu0 %v241
    %1038 = vmatprep.subr.bf16.mxu0 %v244
    %1039 = vmatpush1.bf16.msra.mxu0 %v243
    %1040 = vmatprep.subr.bf16.mxu0 %v246
    %1041 = vmatpush1.bf16.msra.mxu0 %v245
    %1042 = vmatprep.subr.bf16.mxu0 %v248
    %1043 = vmatpush1.bf16.msra.mxu0 %v247
    %1044 = vmatprep.subr.bf16.mxu0 %v250
    %1045 = vmatpush1.bf16.msra.mxu0 %v249
    %1046 = vmatprep.subr.bf16.mxu0 %v252
    %1047 = vmatpush1.bf16.msra.mxu0 %v251
    %1048 = vmatprep.subr.bf16.mxu0 %v254
    %1049 = vmatpush1.bf16.msra.mxu0 %v253
    %1050 = vmatprep.subr.bf16.mxu0 %v256
    %1051 = vmatpush1.bf16.msra.mxu0 %v255
    %1052 = vmatprep.subr.bf16.mxu0 %v258
    %1053 = vmatpush1.bf16.msra.mxu0 %v257
    %1054 = vmatprep.mubr.bf16.mxu0 %v968
    %1055 = vmatmul.mubr.bf16.gmra.mrb[0].mxu0 %v967
    %v1056 = vpop.f32.mrb[0].mxu0
    %v1057 = vadd.f32 %v1014, %v1056
    %v1058 = vpop.f32.mrb[0].mxu0
    %v1059 = vadd.f32 %v1016, %v1058
    %v1060 = vpop.f32.mrb[0].mxu0
    %v1061 = vadd.f32 %v1018, %v1060
    %v1062 = vpop.f32.mrb[0].mxu0
    %v1063 = vadd.f32 %v1020, %v1062
    %1064 = vdwg.mxu0
    %v1065 = vadd.f32 %v1057, 1e-05
    %v1066 = vadd.f32 %v1059, 1e-05
    %v1067 = vadd.f32 %v1061, 1e-05
    %v1068 = vadd.f32 %v1063, 1e-05
    %v1069 = vrsqrt.pop %v1065
    %v1070 = vrsqrt.pop %v1066
    %v1071 = vrsqrt.pop %v1067
    %v1072 = vrsqrt.pop %v1068
    %v1073 = vmul.f32 %v959, %v1069
    %v1074 = vmul.f32 %v960, %v1070
    %v1075 = vmul.f32 %v961, %v1071
    %v1076 = vmul.f32 %v962, %v1072
    %v1077 = vmul.f32 %v1073, %v499
    %v1078 = vmul.f32 %v1074, %v503
    %v1079 = vmul.f32 %v1075, %v499
    %v1080 = vmul.f32 %v1076, %v503
    %v1081 = vadd.f32 %v1077, %v514
    %v1082 = vadd.f32 %v1078, %v518
    %v1083 = vadd.f32 %v1079, %v514
    %v1084 = vadd.f32 %v1080, %v518
    %v1085 = vadd.f32 %v1081, %v1083
    %v1086 = vrot.slane %v1085, 4
    %v1087 = vadd.f32 %v1085, %v1086
    %v1088 = vrot.slane %v1087, 2
    %v1089 = vadd.f32 %v1087, %v1088
    %v1090 = vrot.slane %v1089, 1
    %v1091 = vadd.f32 %v1089, %v1090
    %v1092 = vadd.f32 %v1082, %v1084
    %v1093 = vrot.slane %v1092, 4
    %v1094 = vadd.f32 %v1092, %v1093
    %v1095 = vrot.slane %v1094, 2
    %v1096 = vadd.f32 %v1094, %v1095
    %v1097 = vrot.slane %v1096, 1
    %v1098 = vadd.f32 %v1096, %v1097
    %v1101 = vcombine.low %v1091, %v1098
    %v1103 = vunpack.c.l.s4 1966171168
    %v1104 = vunpack.c.0.s8 %v1103
    %v1105 = vlaneseq
    %v1106 = vshrl.u32 %v1105, 7
    %v1107 = vsub.s32 %v1104, %v1106
    %v1108 = vrot.slane %v1101, %v1107
    %v1110 = vunpack.c.l.s4 1966171168
    %v1111 = vunpack.c.0.s8 %v1110
    %v1112 = vlaneseq
    %v1113 = vshrl.u32 %v1112, 7
    %v1114 = vsub.s32 %v1111, %v1113
    %v1115 = vrot.slane %v1108, %v1114
    %v1117 = vmul.f32 %v111, %v1115
    %v1119 = vlaneseq
    %v1120 = vshrl.u32 %v1119, 7
    %v1121 = vsub.s32 0, %v1120
    %v1122 = vrot.slane %v1117, %v1121
    %v1123 = vlaneseq
    %v1124 = vshrl.u32 %v1123, 7
    %v1125 = vsub.s32 1, %v1124
    %v1126 = vrot.slane %v1117, %v1125
    %v1129 = vsel %vm569, %v1122, 0.0
    %v1130 = vsel %vm569, %v1126, 0.0
    %v1131 = vadd.f32 %v1129, %v1130
    %1132 = vadd.xlane.f32.xlu0 %v1131
    %v1133 = vpop.xlane.xlu0 %1132
    %v1134 = vadd.f32 %v1133, %v112
    %v1135 = vmax.f32 %v1134, 0.0
    %1137 = vset.pattern.permute.xlu0 0
    %1138 = vperm.xlu0 %1137, %v1135
    %v1139 = vpop.permute.xlu0 %1138
    %v1140 = vlaneseq
    %v1141 = vshrl.u32 %v1140, 7
    %v1142 = vsub.s32 0, %v1141
    %v1143 = vrot.slane %v1139, %v1142
    %v1145 = vmul.f32 %v113, %v1143
    %v1146 = vadd.f32 %v1145, 0.0
    %v1147 = vadd.f32 %v1146, %v114
    %v1148 = vtanh.pop %v1147
    %v1150 = vlaneseq
    %v1151 = vshrl.u32 %v1150, 7
    %v1152 = vsub.s32 0, %v1151
    %v1153 = vrot.slane %v1148, %v1152
    %v1154 = vlaneseq
    %v1155 = vshrl.u32 %v1154, 7
    %v1156 = vsub.s32 1, %v1155
    %v1157 = vrot.slane %v1148, %v1156
    %v1160 = vmul.f32 %v1081, %v1153
    %v1161 = vmul.f32 %v1082, %v1157
    %v1162 = vmul.f32 %v1083, %v1153
    %v1163 = vmul.f32 %v1084, %v1157
    %1164 = vrot.lane.b32.xlu0 %v1081, 16
    %v1165 = vpop.permute.xlu0 %1164
    %1166 = vrot.lane.b32.xlu0 %v1083, 16
    %v1167 = vpop.permute.xlu0 %1166
    %1168 = vrot.lane.b32.xlu0 %v1082, 16
    %v1169 = vpop.permute.xlu0 %1168
    %1170 = vrot.lane.b32.xlu0 %v1084, 16
    %v1171 = vpop.permute.xlu0 %1170
    %v1172 = vsel %vm615, %v1165, %v1169
    %v1173 = vsel %vm615, %v1167, %v1171
    %v1174 = vsel %vm615, %v1169, %v1165
    %v1175 = vsel %vm615, %v1171, %v1167
    %v1176 = vsel %vm622, %v1174, 0.0
    %v1177 = vsel %vm623, %v1172, 0.0
    %v1178 = vsel %vm622, %v1175, 0.0
    %v1179 = vsel %vm623, %v1173, 0.0
    %1180 = vrot.lane.b32.xlu0 %v1081, 112
    %v1181 = vpop.permute.xlu0 %1180
    %1182 = vrot.lane.b32.xlu0 %v1083, 112
    %v1183 = vpop.permute.xlu0 %1182
    %1184 = vrot.lane.b32.xlu0 %v1082, 112
    %v1185 = vpop.permute.xlu0 %1184
    %1186 = vrot.lane.b32.xlu0 %v1084, 112
    %v1187 = vpop.permute.xlu0 %1186
    %v1188 = vsel %vm638, %v1181, %v1185
    %v1189 = vsel %vm638, %v1183, %v1187
    %v1190 = vsel %vm638, %v1185, %v1181
    %v1191 = vsel %vm638, %v1187, %v1183
    %v1192 = vsel %vm645, %v1188, 0.0
    %v1193 = vsel %vm646, %v1190, 0.0
    %v1194 = vsel %vm645, %v1189, 0.0
    %v1195 = vsel %vm646, %v1191, 0.0
    %v1196 = vmul.f32 %v1176, %v654
    %v1197 = vmul.f32 %v1177, %v658
    %v1198 = vmul.f32 %v1178, %v654
    %v1199 = vmul.f32 %v1179, %v658
    %v1200 = vmul.f32 %v1081, %v666
    %v1201 = vmul.f32 %v1082, %v670
    %v1202 = vmul.f32 %v1083, %v666
    %v1203 = vmul.f32 %v1084, %v670
    %v1204 = vadd.f32 %v1196, %v1200
    %v1205 = vadd.f32 %v1197, %v1201
    %v1206 = vadd.f32 %v1198, %v1202
    %v1207 = vadd.f32 %v1199, %v1203
    %v1208 = vmul.f32 %v1192, %v682
    %v1209 = vmul.f32 %v1193, %v686
    %v1210 = vmul.f32 %v1194, %v682
    %v1211 = vmul.f32 %v1195, %v686
    %v1212 = vadd.f32 %v1204, %v1208
    %v1213 = vadd.f32 %v1205, %v1209
    %v1214 = vadd.f32 %v1206, %v1210
    %v1215 = vadd.f32 %v1207, %v1211
    %v1216 = vmul.f32 %v1176, %v698
    %v1217 = vmul.f32 %v1177, %v702
    %v1218 = vmul.f32 %v1178, %v698
    %v1219 = vmul.f32 %v1179, %v702
    %v1220 = vmul.f32 %v1081, %v710
    %v1221 = vmul.f32 %v1082, %v714
    %v1222 = vmul.f32 %v1083, %v710
    %v1223 = vmul.f32 %v1084, %v714
    %v1224 = vadd.f32 %v1216, %v1220
    %v1225 = vadd.f32 %v1217, %v1221
    %v1226 = vadd.f32 %v1218, %v1222
    %v1227 = vadd.f32 %v1219, %v1223
    %v1228 = vmul.f32 %v1192, %v726
    %v1229 = vmul.f32 %v1193, %v730
    %v1230 = vmul.f32 %v1194, %v726
    %v1231 = vmul.f32 %v1195, %v730
    %v1232 = vadd.f32 %v1224, %v1228
    %v1233 = vadd.f32 %v1225, %v1229
    %v1234 = vadd.f32 %v1226, %v1230
    %v1235 = vadd.f32 %v1227, %v1231
    %v1236 = vmul.f32 %v1176, %v742
    %v1237 = vmul.f32 %v1177, %v746
    %v1238 = vmul.f32 %v1178, %v742
    %v1239 = vmul.f32 %v1179, %v746
    %v1240 = vmul.f32 %v1081, %v754
    %v1241 = vmul.f32 %v1082, %v758
    %v1242 = vmul.f32 %v1083, %v754
    %v1243 = vmul.f32 %v1084, %v758
    %v1244 = vadd.f32 %v1236, %v1240
    %v1245 = vadd.f32 %v1237, %v1241
    %v1246 = vadd.f32 %v1238, %v1242
    %v1247 = vadd.f32 %v1239, %v1243
    %v1248 = vmul.f32 %v1192, %v770
    %v1249 = vmul.f32 %v1193, %v774
    %v1250 = vmul.f32 %v1194, %v770
    %v1251 = vmul.f32 %v1195, %v774
    %v1252 = vadd.f32 %v1244, %v1248
    %v1253 = vadd.f32 %v1245, %v1249
    %v1254 = vadd.f32 %v1246, %v1250
    %v1255 = vadd.f32 %v1247, %v1251
    %v1256 = vrot.slane %v1212, 7
    %v1257 = vrot.slane %v1213, 7
    %v1258 = vrot.slane %v1214, 7
    %v1259 = vrot.slane %v1215, 7
    %v1260 = vsel %vm789, %v1256, %v1258
    %v1261 = vsel %vm789, %v1257, %v1259
    %v1262 = vsel %vm789, %v1258, %v1256
    %v1263 = vsel %vm789, %v1259, %v1257
    %v1264 = vsel %vm796, %v1262, 0.0
    %v1265 = vsel %vm796, %v1263, 0.0
    %v1266 = vsel %vm797, %v1260, 0.0
    %v1267 = vsel %vm797, %v1261, 0.0
    %v1268 = vadd.f32 %v1232, %v1264
    %v1269 = vadd.f32 %v1233, %v1265
    %v1270 = vadd.f32 %v1234, %v1266
    %v1271 = vadd.f32 %v1235, %v1267
    %v1272 = vrot.slane %v1252, 1
    %v1273 = vrot.slane %v1253, 1
    %v1274 = vrot.slane %v1254, 1
    %v1275 = vrot.slane %v1255, 1
    %v1276 = vsel %vm812, %v1272, %v1274
    %v1277 = vsel %vm812, %v1273, %v1275
    %v1278 = vsel %vm812, %v1274, %v1272
    %v1279 = vsel %vm812, %v1275, %v1273
    %v1280 = vsel %vm819, %v1276, 0.0
    %v1281 = vsel %vm819, %v1277, 0.0
    %v1282 = vsel %vm820, %v1278, 0.0
    %v1283 = vsel %vm820, %v1279, 0.0
    %v1284 = vadd.f32 %v1268, %v1280
    %v1285 = vadd.f32 %v1269, %v1281
    %v1286 = vadd.f32 %v1270, %v1282
    %v1287 = vadd.f32 %v1271, %v1283
    %v1288 = vadd.f32 %v1284, %v833
    %v1289 = vadd.f32 %v1285, %v837
    %v1290 = vadd.f32 %v1286, %v833
    %v1291 = vadd.f32 %v1287, %v837
    %v1292 = vmul.f32 %v1288, %v1160
    %v1293 = vmul.f32 %v1289, %v1161
    %v1294 = vmul.f32 %v1290, %v1162
    %v1295 = vmul.f32 %v1291, %v1163
    %v1296 = vadd.f32 %v1292, %v857
    %v1297 = vadd.f32 %v1293, %v858
    %v1298 = vadd.f32 %v1294, %v859
    %v1299 = vadd.f32 %v1295, %v860
    %s1300 = scalar_lea.vmem [#allocation8], 32
    %1301 = vst [vmem:[%s1300] sm:$0xff] %v1296
    %1302 = vst [vmem:[%s1300 + $0x8] sm:$0xff] %v1297
    %1303 = vst [vmem:[%s1300 + $0x10] sm:$0xff] %v1298
    %1304 = vst [vmem:[%s1300 + $0x18] sm:$0xff] %v1299
    // Predicated region
    $region50: #{tpu_custom_call.1} parent=1 // pred_check
      _
    $region51: #{tpu_custom_call.1} parent=1 // pred_check_branch
      %1306 = sbr.rel (0) target = $region53
    $region52: #{tpu_custom_call.1} parent=1 // pred_region
      %s1308 = ssub.s32 1024, 1024
      %1309 = vsyncadd [#allocation5], %s1308
      %s1310 = sshll.u32 [#allocation8], 4
      %s1311 = int_to_ptr.vmem [resolvable:$true] %s1310
      %1316 = dma.vmem_to_hbm [thread:$0]  %s1311, 1024, %s10, [#allocation5], 256, 256, 16
    $region53: #{tpu_custom_call.1} parent=1 // pred_fallthru
      _
    // Predicated region
    $region54: #{tpu_custom_call.1} parent=1 // pred_check
      _
    $region55: #{tpu_custom_call.1} parent=1 // pred_check_branch
      %1318 = sbr.rel (0) target = $region57
    $region56: #{tpu_custom_call.1} parent=1 // pred_region
      %1319 = dma.done [#allocation5], 1024
    $region57: #{tpu_custom_call.1} parent=1 // pred_fallthru
      _
    %1320 = vsyncpa [#allocation4], 1
    %1321 = vsyncpa [#allocation7], 1
    %1322 = vsyncpa [#allocation5], 1

</llo_original>
